<compile_context>
chip_gen: v6e
topology: v6e:2x2x1
jax: 0.10.0
libtpu: 0.0.40
codegen_flags: <defaults>
</compile_context>

<pallas_src>
import functools

import jax
import jax.numpy as jnp
from jax.experimental import pallas as pl
from jax.experimental.pallas import tpu as pltpu

NEG_SLOPE = 0.1  # nn.LeakyReLU(0.1) in the PyTorch module


# ----------------------------------------------------------------------------
# Fused kernel: per-tap accumulated conv matmuls + folded BN + LeakyReLU +
#               masked global max-pool + fc1(+folded bn_fc) + LeakyReLU + fc2
# ----------------------------------------------------------------------------
def fused_textcnn_kernel(x_ref, wc_ref, bc_ref, vl_ref, w1_ref, b1_ref,
                         w2_ref, b2_ref, o_ref, *, fs_max, t_out):
    # x_ref:  (B, Lp, E)  bf16   embedded text, zero-padded, Lp >= T + fs_max - 1
    # wc_ref: (fs_max, E, N) bf16  stacked, tap-padded, BN-folded conv weights
    # bc_ref: (1, N) f32           BN-folded conv biases
    # vl_ref: (1, N) int32         valid conv length per output channel
    # w1_ref: (N, H) bf16  b1_ref: (1, H) f32     fc1 with bn_fc folded in
    # w2_ref: (H, 128) bf16 b2_ref: (1, 128) f32  fc2, lane-padded
    # o_ref:  (B, 128) f32         lane-padded logits
    B, _, E = x_ref.shape
    N = wc_ref.shape[-1]
    x = x_ref[...]                                          # (B, Lp, E) bf16

    # Unrolled per-tap matmuls, each flattened to a single 2-D MXU call.
    # No lane-offset concat; accumulate in f32.
    acc = jnp.zeros((B * t_out, N), jnp.float32)
    for k in range(fs_max):                                 # static unroll
        xk = x[:, k:k + t_out, :].reshape(B * t_out, E)     # T % 8 == 0 -> free reshape
        acc = acc + jnp.dot(xk, wc_ref[k],
                            preferred_element_type=jnp.float32)

    y = acc.reshape(B, t_out, N) + bc_ref[...]              # conv bias (BN folded), f32
    y = jnp.where(y > 0, y, NEG_SLOPE * y)                  # LeakyReLU(0.1), f32

    # Mask rows past each branch's valid conv length, then global max-pool (f32).
    row = jax.lax.broadcasted_iota(jnp.int32, y.shape, 1)
    y = jnp.where(row < vl_ref[...], y, -jnp.inf)
    pooled = jnp.max(y, axis=1)                             # (B, N)  == torch.cat

    # fc1 (+ folded bn_fc) -> LeakyReLU -> fc2 (lane-padded dense store).
    h = jnp.dot(pooled.astype(jnp.bfloat16), w1_ref[...],
                preferred_element_type=jnp.float32) + b1_ref[...]
    h = jnp.where(h > 0, h, NEG_SLOPE * h)
    o_ref[...] = jnp.dot(h.astype(jnp.bfloat16), w2_ref[...],
                         preferred_element_type=jnp.float32) + b2_ref[...]


def run_fused(x_pad, wc, bc, vl, w1, b1, w2, b2, *, fs_max, t_out, B, n_lanes):
    E = x_pad.shape[-1]
    N = wc.shape[-1]
    H = w1.shape[-1]
    args = (x_pad, wc, bc, vl, w1, b1, w2, b2)
    bytes_in = sum(int(a.size) * a.dtype.itemsize for a in args)
    cost = pl.CostEstimate(
        flops=2 * B * t_out * E * N * fs_max + 2 * B * N * H + 2 * B * H * n_lanes,
        transcendentals=0,
        bytes_accessed=bytes_in + B * n_lanes * 4)
    vmem = pl.BlockSpec(memory_space=pltpu.MemorySpace.VMEM)
    return pl.pallas_call(
        functools.partial(fused_textcnn_kernel, fs_max=fs_max, t_out=t_out),
        out_shape=jax.ShapeDtypeStruct((B, n_lanes), jnp.float32),
        in_specs=[vmem] * len(args),
        out_specs=vmem,
        cost_estimate=cost,
        # Resident footprint ~0.6 MB; explicit budget so future scaling is deliberate.
        compiler_params=pltpu.CompilerParams(vmem_limit_bytes=16 * 1024 * 1024),
    )(*args)


# ----------------------------------------------------------------------------
# One-time parameter preparation (BN folding, stacking, lane padding, bf16 cast).
# Done ONCE at param-load time; NOT re-executed per forward call.
# ----------------------------------------------------------------------------
def prepare_params(params, *, filter_sizes, num_filters, num_class, seq_len):
    eps = 1e-5
    F = num_filters
    n_br = len(filter_sizes)
    L = seq_len
    pads = [fs // 2 for fs in filter_sizes]
    l_outs = [L + 2 * p - fs + 1 for fs, p in zip(filter_sizes, pads)]
    fs_max = max(filter_sizes)
    P = max(pads)
    T = ((max(l_outs) + 7) // 8) * 8                 # sublane-aligned conv rows
    Lp = ((T + fs_max - 1 + 7) // 8) * 8             # sublane-aligned padded length
    E = params["embedding"].shape[1]

    # Fold BN(eval) into conv weights/biases; stack branches along N (lane-dense 512).
    w_blocks, b_blocks, vl_blocks = [], [], []
    for i, (fs, p, lo) in enumerate(zip(filter_sizes, pads, l_outs)):
        gamma, beta, mean, var = params[f"bn{i}"]
        scale = gamma / jnp.sqrt(var + eps)          # (F,)
        shift = beta - mean * scale
        w = params[f"conv{i}_w"] * scale[:, None, None]     # (F, E, fs)
        w = jnp.transpose(w, (2, 1, 0))                     # (fs, E, F)
        d = P - p                                           # tap offset in shared frame
        w = jnp.pad(w, ((d, fs_max - fs - d), (0, 0), (0, 0)))  # (fs_max, E, F)
        w_blocks.append(w)
        b_blocks.append(params[f"conv{i}_b"] * scale + shift)
        vl_blocks.append(jnp.full((F,), lo, jnp.int32))
    wc = jnp.concatenate(w_blocks, axis=2)                  # (fs_max, E, n_br*F)
    bc = jnp.concatenate(b_blocks).reshape(1, n_br * F)
    vl = jnp.concatenate(vl_blocks).reshape(1, n_br * F)

    # Fold bn_fc into fc1.
    gamma, beta, mean, var = params["bn_fc"]
    scale = gamma / jnp.sqrt(var + eps)
    shift = beta - mean * scale
    H = gamma.shape[0]
    w1 = params["fc1_w"].T * scale[None, :]                 # (n_br*F, H)
    b1 = (params["fc1_b"] * scale + shift).reshape(1, H)

    # fc2, lane-padded to a multiple of 128 for a dense output store.
    n_lanes = max(128, ((num_class + 127) // 128) * 128)
    w2 = jnp.zeros((H, n_lanes), jnp.float32).at[:, :num_class].set(
        params["fc2_w"].T)
    b2 = jnp.zeros((1, n_lanes), jnp.float32).at[:, :num_class].set(
        params["fc2_b"])

    prep = {
        "embedding": params["embedding"].astype(jnp.float32),
        "wc": wc.astype(jnp.bfloat16),      # MXU operand -> bf16 (halves weight DMA)
        "bc": bc.astype(jnp.float32),
        "vl": vl,
        "w1": w1.astype(jnp.bfloat16),
        "b1": b1.astype(jnp.float32),
        "w2": w2.astype(jnp.bfloat16),
        "b2": b2.astype(jnp.float32),
    }
    meta = dict(fs_max=fs_max, P=P, T=T, Lp=Lp, n_lanes=n_lanes)
    return prep, meta


# ----------------------------------------------------------------------------
# Per-call forward: embedding gather + pad + single fused Pallas kernel.
# ----------------------------------------------------------------------------
def enhanced_text_cnn_forward(text, prep, *, P, Lp, T, fs_max, n_lanes, num_class):
    B, L = text.shape
    # Embedding lookup (gather); dropout1 = identity in eval mode.
    embedded = jnp.take(prep["embedding"], text, axis=0)            # (B, L, E) f32
    x_pad = jnp.pad(embedded, ((0, 0), (P, Lp - L - P), (0, 0)))
    x_pad = x_pad.astype(jnp.bfloat16)                              # bf16 MXU operand
    logits = run_fused(x_pad, prep["wc"], prep["bc"], prep["vl"],
                       prep["w1"], prep["b1"], prep["w2"], prep["b2"],
                       fs_max=fs_max, t_out=T, B=B, n_lanes=n_lanes)
    return logits[:, :num_class]


# ----------------------------------------------------------------------------
# Pure-JAX f32 reference (no Pallas) for correctness checking.
# ----------------------------------------------------------------------------
def reference_forward(text, params, *, filter_sizes, num_filters, num_class):
    eps = 1e-5
    emb = jnp.take(params["embedding"], text, axis=0)               # (B, L, E)
    x = jnp.transpose(emb, (0, 2, 1))                               # (B, E, L)
    outs = []
    for i, fs in enumerate(filter_sizes):
        p = fs // 2
        y = jax.lax.conv_general_dilated(
            x, params[f"conv{i}_w"], (1,), [(p, p)],
            dimension_numbers=("NCH", "OIH", "NCH"))
        y = y + params[f"conv{i}_b"][None, :, None]
        gamma, beta, mean, var = params[f"bn{i}"]
        scale = gamma / jnp.sqrt(var + eps)
        y = (y - mean[None, :, None]) * scale[None, :, None] + beta[None, :, None]
        y = jnp.where(y > 0, y, NEG_SLOPE * y)
        outs.append(jnp.max(y, axis=2))                             # (B, F)
    cat = jnp.concatenate(outs, axis=1)
    gamma, beta, mean, var = params["bn_fc"]
    scale = gamma / jnp.sqrt(var + eps)
    h = cat @ params["fc1_w"].T + params["fc1_b"]
    h = (h - mean) * scale + beta
    h = jnp.where(h > 0, h, NEG_SLOPE * h)
    return h @ params["fc2_w"].T + params["fc2_b"]


# ----------------------------------------------------------------------------
# Deterministic parameter construction (PyTorch-native layouts)
# ----------------------------------------------------------------------------
def make_params(key, *, vocab_size, embed_dim, num_class, filter_sizes,
                num_filters):
    keys = jax.random.split(key, 40)
    ki = iter(keys)
    params = {}

    emb = 0.1 * jax.random.normal(next(ki), (vocab_size, embed_dim), jnp.float32)
    emb = emb.at[0].set(0.0)                      # padding_idx=0 row is zero
    params["embedding"] = emb

    F = num_filters
    for i, fs in enumerate(filter_sizes):
        params[f"conv{i}_w"] = 0.1 * jax.random.normal(
            next(ki), (F, embed_dim, fs), jnp.float32)          # PyTorch (F, E, fs)
        params[f"conv{i}_b"] = 0.05 * jax.random.normal(next(ki), (F,), jnp.float32)
        gamma = 1.0 + 0.1 * jax.random.normal(next(ki), (F,), jnp.float32)
        beta = 0.1 * jax.random.normal(next(ki), (F,), jnp.float32)
        mean = 0.1 * jax.random.normal(next(ki), (F,), jnp.float32)
        var = 1.0 + 0.1 * jax.random.uniform(next(ki), (F,), jnp.float32)
        params[f"bn{i}"] = (gamma, beta, mean, var)

    total = len(filter_sizes) * F
    hdim = total // 2
    params["fc1_w"] = 0.05 * jax.random.normal(next(ki), (hdim, total), jnp.float32)
    params["fc1_b"] = 0.05 * jax.random.normal(next(ki), (hdim,), jnp.float32)
    gamma = 1.0 + 0.1 * jax.random.normal(next(ki), (hdim,), jnp.float32)
    beta = 0.1 * jax.random.normal(next(ki), (hdim,), jnp.float32)
    mean = 0.1 * jax.random.normal(next(ki), (hdim,), jnp.float32)
    var = 1.0 + 0.1 * jax.random.uniform(next(ki), (hdim,), jnp.float32)
    params["bn_fc"] = (gamma, beta, mean, var)
    params["fc2_w"] = 0.05 * jax.random.normal(next(ki), (num_class, hdim),
                                               jnp.float32)
    params["fc2_b"] = 0.05 * jax.random.normal(next(ki), (num_class,), jnp.float32)
    return params


if __name__ == "__main__":
    vocab_size = 50
    embed_dim = 32
    num_class = 4
    filter_sizes = [2, 3, 4, 5]
    num_filters = 128
    B, L = 2, 16

    key = jax.random.PRNGKey(0)
    k_params, k_text = jax.random.split(key)
    params = make_params(k_params, vocab_size=vocab_size, embed_dim=embed_dim,
                         num_class=num_class, filter_sizes=filter_sizes,
                         num_filters=num_filters)
    text = jax.random.randint(k_text, (B, L), minval=1, maxval=vocab_size,
                              dtype=jnp.int32)

    # One-time weight preparation (hoisted out of the per-call forward).
    prep, meta = prepare_params(params, filter_sizes=filter_sizes,
                                num_filters=num_filters, num_class=num_class,
                                seq_len=L)

    fwd = jax.jit(functools.partial(enhanced_text_cnn_forward,
                                    num_class=num_class, **meta))
    logits = fwd(text, prep)
    jax.block_until_ready(logits)
    assert logits.shape == (B, num_class)

    # f32 reference; tolerance is bf16-matmul-appropriate (kernel uses bf16 MXU operands).
    ref = reference_forward(text, params, filter_sizes=filter_sizes,
                            num_filters=num_filters, num_class=num_class)
    assert jnp.allclose(logits, ref, rtol=3e-2, atol=3e-2), (logits, ref)

    print("KERNEL_OK")
</pallas_src>

<mosaic_0001>
module attributes {stable_mosaic.version = 11 : i64} {
  func.func @fused_textcnn_kernel(%arg0: memref<2x32x32xbf16, #tpu.memory_space<vmem>>, %arg1: memref<5x32x512xbf16, #tpu.memory_space<vmem>>, %arg2: memref<1x512xf32, #tpu.memory_space<vmem>>, %arg3: memref<1x512xi32, #tpu.memory_space<vmem>>, %arg4: memref<512x256xbf16, #tpu.memory_space<vmem>>, %arg5: memref<1x256xf32, #tpu.memory_space<vmem>>, %arg6: memref<256x128xbf16, #tpu.memory_space<vmem>>, %arg7: memref<1x128xf32, #tpu.memory_space<vmem>>, %arg8: memref<2x128xf32, #tpu.memory_space<vmem>>) attributes {dimension_semantics = [], scalar_prefetch = 0 : i64, scratch_operands = 0 : i64, tpu.core_type = #tpu.core_type<tc>} {
    %c0 = arith.constant 0 : index
    %c0_0 = arith.constant 0 : index
    %c0_1 = arith.constant 0 : index
    %0 = vector.load %arg0[%c0, %c0_0, %c0_1] : memref<2x32x32xbf16, #tpu.memory_space<vmem>>, vector<2x32x32xbf16>
    %cst = arith.constant 0.000000e+00 : f32
    %1 = vector.broadcast %cst : f32 to vector<48x512xf32>
    %2 = vector.extract_strided_slice %0 {offsets = [0, 0, 0], sizes = [2, 24, 32], strides = [1, 1, 1]} : vector<2x32x32xbf16> to vector<2x24x32xbf16>
    %3 = vector.shape_cast %2 : vector<2x24x32xbf16> to vector<48x32xbf16>
    %c0_2 = arith.constant 0 : index
    %c0_3 = arith.constant 0 : index
    %c0_4 = arith.constant 0 : index
    %4 = vector.load %arg1[%c0_2, %c0_3, %c0_4] : memref<5x32x512xbf16, #tpu.memory_space<vmem>>, vector<1x32x512xbf16>
    %5 = vector.shape_cast %4 : vector<1x32x512xbf16> to vector<32x512xbf16>
    %cst_5 = arith.constant dense<0.000000e+00> : vector<48x512xf32>
    %6 = tpu.matmul %3, %5, %cst_5 {dimension_numbers = #tpu.dot_dimension_numbers<[1], [0], [0], [1], [0, 0, 1, 1], [], []>} : vector<48x32xbf16>, vector<32x512xbf16>, vector<48x512xf32> -> vector<48x512xf32>
    %7 = arith.addf %1, %6 : vector<48x512xf32>
    %8 = vector.extract_strided_slice %0 {offsets = [0, 1, 0], sizes = [2, 24, 32], strides = [1, 1, 1]} : vector<2x32x32xbf16> to vector<2x24x32xbf16>
    %9 = vector.shape_cast %8 : vector<2x24x32xbf16> to vector<48x32xbf16>
    %c1 = arith.constant 1 : index
    %c0_6 = arith.constant 0 : index
    %c0_7 = arith.constant 0 : index
    %10 = vector.load %arg1[%c1, %c0_6, %c0_7] : memref<5x32x512xbf16, #tpu.memory_space<vmem>>, vector<1x32x512xbf16>
    %11 = vector.shape_cast %10 : vector<1x32x512xbf16> to vector<32x512xbf16>
    %cst_8 = arith.constant dense<0.000000e+00> : vector<48x512xf32>
    %12 = tpu.matmul %9, %11, %cst_8 {dimension_numbers = #tpu.dot_dimension_numbers<[1], [0], [0], [1], [0, 0, 1, 1], [], []>} : vector<48x32xbf16>, vector<32x512xbf16>, vector<48x512xf32> -> vector<48x512xf32>
    %13 = arith.addf %7, %12 : vector<48x512xf32>
    %14 = vector.extract_strided_slice %0 {offsets = [0, 2, 0], sizes = [2, 24, 32], strides = [1, 1, 1]} : vector<2x32x32xbf16> to vector<2x24x32xbf16>
    %15 = vector.shape_cast %14 : vector<2x24x32xbf16> to vector<48x32xbf16>
    %c2 = arith.constant 2 : index
    %c0_9 = arith.constant 0 : index
    %c0_10 = arith.constant 0 : index
    %16 = vector.load %arg1[%c2, %c0_9, %c0_10] : memref<5x32x512xbf16, #tpu.memory_space<vmem>>, vector<1x32x512xbf16>
    %17 = vector.shape_cast %16 : vector<1x32x512xbf16> to vector<32x512xbf16>
    %cst_11 = arith.constant dense<0.000000e+00> : vector<48x512xf32>
    %18 = tpu.matmul %15, %17, %cst_11 {dimension_numbers = #tpu.dot_dimension_numbers<[1], [0], [0], [1], [0, 0, 1, 1], [], []>} : vector<48x32xbf16>, vector<32x512xbf16>, vector<48x512xf32> -> vector<48x512xf32>
    %19 = arith.addf %13, %18 : vector<48x512xf32>
    %20 = vector.extract_strided_slice %0 {offsets = [0, 3, 0], sizes = [2, 24, 32], strides = [1, 1, 1]} : vector<2x32x32xbf16> to vector<2x24x32xbf16>
    %21 = vector.shape_cast %20 : vector<2x24x32xbf16> to vector<48x32xbf16>
    %c3 = arith.constant 3 : index
    %c0_12 = arith.constant 0 : index
    %c0_13 = arith.constant 0 : index
    %22 = vector.load %arg1[%c3, %c0_12, %c0_13] : memref<5x32x512xbf16, #tpu.memory_space<vmem>>, vector<1x32x512xbf16>
    %23 = vector.shape_cast %22 : vector<1x32x512xbf16> to vector<32x512xbf16>
    %cst_14 = arith.constant dense<0.000000e+00> : vector<48x512xf32>
    %24 = tpu.matmul %21, %23, %cst_14 {dimension_numbers = #tpu.dot_dimension_numbers<[1], [0], [0], [1], [0, 0, 1, 1], [], []>} : vector<48x32xbf16>, vector<32x512xbf16>, vector<48x512xf32> -> vector<48x512xf32>
    %25 = arith.addf %19, %24 : vector<48x512xf32>
    %26 = vector.extract_strided_slice %0 {offsets = [0, 4, 0], sizes = [2, 24, 32], strides = [1, 1, 1]} : vector<2x32x32xbf16> to vector<2x24x32xbf16>
    %27 = vector.shape_cast %26 : vector<2x24x32xbf16> to vector<48x32xbf16>
    %c4 = arith.constant 4 : index
    %c0_15 = arith.constant 0 : index
    %c0_16 = arith.constant 0 : index
    %28 = vector.load %arg1[%c4, %c0_15, %c0_16] : memref<5x32x512xbf16, #tpu.memory_space<vmem>>, vector<1x32x512xbf16>
    %29 = vector.shape_cast %28 : vector<1x32x512xbf16> to vector<32x512xbf16>
    %cst_17 = arith.constant dense<0.000000e+00> : vector<48x512xf32>
    %30 = tpu.matmul %27, %29, %cst_17 {dimension_numbers = #tpu.dot_dimension_numbers<[1], [0], [0], [1], [0, 0, 1, 1], [], []>} : vector<48x32xbf16>, vector<32x512xbf16>, vector<48x512xf32> -> vector<48x512xf32>
    %31 = arith.addf %25, %30 : vector<48x512xf32>
    %32 = vector.shape_cast %31 : vector<48x512xf32> to vector<2x24x512xf32>
    %c0_18 = arith.constant 0 : index
    %c0_19 = arith.constant 0 : index
    %33 = vector.load %arg2[%c0_18, %c0_19] : memref<1x512xf32, #tpu.memory_space<vmem>>, vector<1x512xf32>
    %34 = vector.shape_cast %33 : vector<1x512xf32> to vector<1x1x512xf32>
    %35 = vector.broadcast %34 : vector<1x1x512xf32> to vector<2x24x512xf32>
    %36 = arith.addf %32, %35 : vector<2x24x512xf32>
    %cst_20 = arith.constant 0.000000e+00 : f32
    %37 = vector.broadcast %cst_20 : f32 to vector<2x24x512xf32>
    %38 = arith.cmpf ogt, %36, %37 : vector<2x24x512xf32>
    %cst_21 = arith.constant 1.000000e-01 : f32
    %39 = vector.broadcast %cst_21 : f32 to vector<2x24x512xf32>
    %40 = arith.mulf %39, %36 : vector<2x24x512xf32>
    %41 = arith.select %38, %36, %40 : vector<2x24x512xi1>, vector<2x24x512xf32>
    %42 = tpu.iota {dimensions = array<i32: 1>} : vector<2x24x512xi32>
    %c0_22 = arith.constant 0 : index
    %c0_23 = arith.constant 0 : index
    %43 = vector.load %arg3[%c0_22, %c0_23] : memref<1x512xi32, #tpu.memory_space<vmem>>, vector<1x512xi32>
    %44 = vector.shape_cast %43 : vector<1x512xi32> to vector<1x1x512xi32>
    %45 = vector.broadcast %44 : vector<1x1x512xi32> to vector<2x24x512xi32>
    %46 = arith.cmpi slt, %42, %45 : vector<2x24x512xi32>
    %cst_24 = arith.constant 0xFF800000 : f32
    %47 = vector.broadcast %cst_24 : f32 to vector<2x24x512xf32>
    %48 = arith.select %46, %41, %47 : vector<2x24x512xi1>, vector<2x24x512xf32>
    %cst_25 = arith.constant dense<0xFF800000> : vector<2x512xf32>
    %49 = vector.multi_reduction <maximumf>, %48, %cst_25 [1] : vector<2x24x512xf32> to vector<2x512xf32>
    %50 = arith.truncf %49 : vector<2x512xf32> to vector<2x512xbf16>
    %c0_26 = arith.constant 0 : index
    %c0_27 = arith.constant 0 : index
    %51 = vector.load %arg4[%c0_26, %c0_27] : memref<512x256xbf16, #tpu.memory_space<vmem>>, vector<512x256xbf16>
    %cst_28 = arith.constant dense<0.000000e+00> : vector<2x256xf32>
    %52 = tpu.matmul %50, %51, %cst_28 {dimension_numbers = #tpu.dot_dimension_numbers<[1], [0], [0], [1], [0, 0, 1, 1], [], []>} : vector<2x512xbf16>, vector<512x256xbf16>, vector<2x256xf32> -> vector<2x256xf32>
    %c0_29 = arith.constant 0 : index
    %c0_30 = arith.constant 0 : index
    %53 = vector.load %arg5[%c0_29, %c0_30] : memref<1x256xf32, #tpu.memory_space<vmem>>, vector<1x256xf32>
    %54 = vector.broadcast %53 : vector<1x256xf32> to vector<2x256xf32>
    %55 = arith.addf %52, %54 : vector<2x256xf32>
    %cst_31 = arith.constant 0.000000e+00 : f32
    %56 = vector.broadcast %cst_31 : f32 to vector<2x256xf32>
    %57 = arith.cmpf ogt, %55, %56 : vector<2x256xf32>
    %cst_32 = arith.constant 1.000000e-01 : f32
    %58 = vector.broadcast %cst_32 : f32 to vector<2x256xf32>
    %59 = arith.mulf %58, %55 : vector<2x256xf32>
    %60 = arith.select %57, %55, %59 : vector<2x256xi1>, vector<2x256xf32>
    %61 = arith.truncf %60 : vector<2x256xf32> to vector<2x256xbf16>
    %c0_33 = arith.constant 0 : index
    %c0_34 = arith.constant 0 : index
    %62 = vector.load %arg6[%c0_33, %c0_34] : memref<256x128xbf16, #tpu.memory_space<vmem>>, vector<256x128xbf16>
    %cst_35 = arith.constant dense<0.000000e+00> : vector<2x128xf32>
    %63 = tpu.matmul %61, %62, %cst_35 {dimension_numbers = #tpu.dot_dimension_numbers<[1], [0], [0], [1], [0, 0, 1, 1], [], []>} : vector<2x256xbf16>, vector<256x128xbf16>, vector<2x128xf32> -> vector<2x128xf32>
    %c0_36 = arith.constant 0 : index
    %c0_37 = arith.constant 0 : index
    %64 = vector.load %arg7[%c0_36, %c0_37] : memref<1x128xf32, #tpu.memory_space<vmem>>, vector<1x128xf32>
    %65 = vector.broadcast %64 : vector<1x128xf32> to vector<2x128xf32>
    %66 = arith.addf %63, %65 : vector<2x128xf32>
    %c0_38 = arith.constant 0 : index
    %c0_39 = arith.constant 0 : index
    %67 = vector.load %arg8[%c0_38, %c0_39] : memref<2x128xf32, #tpu.memory_space<vmem>>, vector<2x128xf32>
    tpu.vector_store %arg8[%c0_38, %c0_39], %66 {strides = array<i32>} : memref<2x128xf32, #tpu.memory_space<vmem>>, vector<2x128xf32>,
    return
  }
}

</mosaic_0001>

<llo_original>
// kernel: enhanced_text_cnn_forward.1
$region0: #{enhanced_text_cnn_forward.1}
  #allocation0 [shape = 'u32[]', space=smem, size = 0x4, offset = 0x4, fixed_abs, tag = 'smem constant byte address 0x4 - core index']
  #allocation1 [shape = 'u32[144,128]{1,0:T(1,128)}', space=vmem, size = 0x12000, scoped, tag = 'internal scratch']
  %s0 = inlined_call_operand.vmem [shape: bf16[2,32,32], index: 0, kind: input, shape index: {}]
  %s1 = inlined_call_operand.hbm [shape: bf16[5,32,512], index: 1, kind: input, shape index: {}]
  %s2 = inlined_call_operand.vmem [shape: f32[1,512], index: 2, kind: input, shape index: {}]
  %s3 = inlined_call_operand.vmem [shape: s32[1,512], index: 3, kind: input, shape index: {}]
  %s4 = inlined_call_operand.hbm [shape: bf16[512,256], index: 4, kind: input, shape index: {}]
  %s5 = inlined_call_operand.vmem [shape: f32[1,256], index: 5, kind: input, shape index: {}]
  %s6 = inlined_call_operand.vmem [shape: bf16[256,128], index: 6, kind: input, shape index: {}]
  %s7 = inlined_call_operand.vmem [shape: f32[1,128], index: 7, kind: input, shape index: {}]
  %s8 = inlined_call_operand.hbm [shape: f32[2,128], index: 8, kind: output, shape index: {}]
  %s9 = sld [smem:[#allocation0]]
  $region50: #{enhanced_text_cnn_forward.1} parent=0
    _
  %s11 = ssub.s32 1, %s9
  %s12 = scalar_select 0, %s11, %s9
  $region1: #{enhanced_text_cnn_forward.1} parent=0
    #allocation2 [shape = 'u8[163840]{0}', space=vmem, size = 0x28000, scoped, tag = 'input window, operand 1, single buffered']
    #allocation3 [shape = 's32[1]{0}', space=sflag, size = 0x4, scoped, tag = 'scoped memory for enhanced_text_cnn_forward.1']
    #allocation4 [shape = 's32[1]{0}', space=sflag, size = 0x4, scoped, tag = 'scoped memory for enhanced_text_cnn_forward.1']
    #allocation5 [shape = 'u8[262144]{0}', space=vmem, size = 0x40000, scoped, tag = 'input window, operand 4, single buffered']
    #allocation6 [shape = 's32[1]{0}', space=sflag, size = 0x4, scoped, tag = 'scoped memory for enhanced_text_cnn_forward.1']
    #allocation7 [shape = 'u8[1024]{0}', space=vmem, size = 0x400, scoped, tag = 'output window, operand 0, single buffered']
    %13 = vsyncpa [#allocation3], 0
    %14 = vsyncpa [#allocation6], 0
    %15 = vsyncpa [#allocation4], 0
    // Predicated region
    $region2: #{enhanced_text_cnn_forward.1} parent=1 // pred_check
      _
    $region3: #{enhanced_text_cnn_forward.1} parent=1 // pred_check_branch
      %17 = sbr.rel (0) target = $region5
    $region4: #{enhanced_text_cnn_forward.1} parent=1 // pred_region
      _
    $region5: #{enhanced_text_cnn_forward.1} parent=1 // pred_fallthru
      _
    // Predicated region
    $region6: #{enhanced_text_cnn_forward.1} parent=1 // pred_check
      _
    $region7: #{enhanced_text_cnn_forward.1} parent=1 // pred_check_branch
      %19 = sbr.rel (0) target = $region9
    $region8: #{enhanced_text_cnn_forward.1} parent=1 // pred_region
      %s21 = ssub.s32 5120, 5120
      %22 = vsyncadd [#allocation3], %s21
      %s23 = sshll.u32 [#allocation2], 4
      %s24 = int_to_ptr.vmem [resolvable:$true] %s23
      %29 = dma.hbm_to_vmem [thread:$0]  %s1, 5120, %s24, [#allocation3], 256, 256, 16
    $region9: #{enhanced_text_cnn_forward.1} parent=1 // pred_fallthru
      _
    // Predicated region
    $region10: #{enhanced_text_cnn_forward.1} parent=1 // pred_check
      _
    $region11: #{enhanced_text_cnn_forward.1} parent=1 // pred_check_branch
      %31 = sbr.rel (0) target = $region13
    $region12: #{enhanced_text_cnn_forward.1} parent=1 // pred_region
      _
    $region13: #{enhanced_text_cnn_forward.1} parent=1 // pred_fallthru
      _
    // Predicated region
    $region14: #{enhanced_text_cnn_forward.1} parent=1 // pred_check
      _
    $region15: #{enhanced_text_cnn_forward.1} parent=1 // pred_check_branch
      %33 = sbr.rel (0) target = $region17
    $region16: #{enhanced_text_cnn_forward.1} parent=1 // pred_region
      _
    $region17: #{enhanced_text_cnn_forward.1} parent=1 // pred_fallthru
      _
    // Predicated region
    $region18: #{enhanced_text_cnn_forward.1} parent=1 // pred_check
      _
    $region19: #{enhanced_text_cnn_forward.1} parent=1 // pred_check_branch
      %35 = sbr.rel (0) target = $region21
    $region20: #{enhanced_text_cnn_forward.1} parent=1 // pred_region
      %s37 = ssub.s32 8192, 8192
      %38 = vsyncadd [#allocation6], %s37
      %s39 = sshll.u32 [#allocation5], 4
      %s40 = int_to_ptr.vmem [resolvable:$true] %s39
      %45 = dma.hbm_to_vmem [thread:$0]  %s4, 8192, %s40, [#allocation6], 128, 128, 8
    $region21: #{enhanced_text_cnn_forward.1} parent=1 // pred_fallthru
      _
    // Predicated region
    $region22: #{enhanced_text_cnn_forward.1} parent=1 // pred_check
      _
    $region23: #{enhanced_text_cnn_forward.1} parent=1 // pred_check_branch
      %47 = sbr.rel (0) target = $region25
    $region24: #{enhanced_text_cnn_forward.1} parent=1 // pred_region
      _
    $region25: #{enhanced_text_cnn_forward.1} parent=1 // pred_fallthru
      _
    // Predicated region
    $region26: #{enhanced_text_cnn_forward.1} parent=1 // pred_check
      _
    $region27: #{enhanced_text_cnn_forward.1} parent=1 // pred_check_branch
      %49 = sbr.rel (0) target = $region29
    $region28: #{enhanced_text_cnn_forward.1} parent=1 // pred_region
      _
    $region29: #{enhanced_text_cnn_forward.1} parent=1 // pred_fallthru
      _
    // Predicated region
    $region30: #{enhanced_text_cnn_forward.1} parent=1 // pred_check
      _
    $region31: #{enhanced_text_cnn_forward.1} parent=1 // pred_check_branch
      %51 = sbr.rel (0) target = $region33
    $region32: #{enhanced_text_cnn_forward.1} parent=1 // pred_region
      _
    $region33: #{enhanced_text_cnn_forward.1} parent=1 // pred_fallthru
      _
    // Predicated region
    $region34: #{enhanced_text_cnn_forward.1} parent=1 // pred_check
      _
    $region35: #{enhanced_text_cnn_forward.1} parent=1 // pred_check_branch
      %53 = sbr.rel (0) target = $region37
    $region36: #{enhanced_text_cnn_forward.1} parent=1 // pred_region
      %54 = dma.done [#allocation3], 5120
    $region37: #{enhanced_text_cnn_forward.1} parent=1 // pred_fallthru
      _
    // Predicated region
    $region38: #{enhanced_text_cnn_forward.1} parent=1 // pred_check
      _
    $region39: #{enhanced_text_cnn_forward.1} parent=1 // pred_check_branch
      %56 = sbr.rel (0) target = $region41
    $region40: #{enhanced_text_cnn_forward.1} parent=1 // pred_region
      %57 = dma.done [#allocation6], 8192
    $region41: #{enhanced_text_cnn_forward.1} parent=1 // pred_fallthru
      _
    %v59 = vld [vmem:[%s0] sm:$0xf]
    %v60 = vld [vmem:[%s0 + $0x4] sm:$0xf]
    %v61 = vld [vmem:[%s0 + $0x8] sm:$0xf]
    %v62 = vld [vmem:[%s0 + $0xc] sm:$0xf]
    %v63 = vld [vmem:[%s0 + $0x10] sm:$0xf]
    %v64 = vld [vmem:[%s0 + $0x14] sm:$0xf]
    %v65 = vld [vmem:[%s0 + $0x18] sm:$0xf]
    %v66 = vld [vmem:[%s0 + $0x1c] sm:$0xf]
    %v67 = vld [vmem:[#allocation2] sm:$0xff]
    %v68 = vld [vmem:[#allocation2 + $0x8] sm:$0xff]
    %v69 = vld [vmem:[#allocation2 + $0x10] sm:$0xff]
    %v70 = vld [vmem:[#allocation2 + $0x18] sm:$0xff]
    %v71 = vld [vmem:[#allocation2 + $0x20] sm:$0xff]
    %v72 = vld [vmem:[#allocation2 + $0x28] sm:$0xff]
    %v73 = vld [vmem:[#allocation2 + $0x30] sm:$0xff]
    %v74 = vld [vmem:[#allocation2 + $0x38] sm:$0xff]
    %vm75 = vsmask.f32 3328
    %vm76 = vsmask.f32 7440
    %vm77 = vmor %vm75, %vm76
    %v79 = vshrl.u32 %v59, 16
    %v81 = vrot.slane %v79, 4
    %v82 = vshll.u32 %v59, 16
    %v84 = vrot.slane %v82, 5
    %v85 = vor.u32 %v81, %v84
    %v86 = vrot.slane %v85, 4
    %v88 = vshll.u32 %v60, 16
    %v90 = vrot.slane %v88, 5
    %v91 = vsel %vm77, %v86, %v90
    %v92 = vshrl.u32 %v60, 16
    %v94 = vrot.slane %v92, 4
    %v95 = vor.u32 %v94, %v90
    %v96 = vrot.slane %v95, 4
    %v98 = vshll.u32 %v61, 16
    %v100 = vrot.slane %v98, 5
    %v101 = vsel %vm77, %v96, %v100
    %v102 = vshrl.u32 %v61, 16
    %v104 = vrot.slane %v102, 4
    %v105 = vor.u32 %v104, %v100
    %v106 = vrot.slane %v105, 4
    %v108 = vshll.u32 %v62, 16
    %v110 = vrot.slane %v108, 5
    %v111 = vsel %vm77, %v106, %v110
    %v113 = vshrl.u32 %v63, 16
    %v115 = vrot.slane %v113, 4
    %v116 = vshll.u32 %v63, 16
    %v118 = vrot.slane %v116, 5
    %v119 = vor.u32 %v115, %v118
    %v120 = vrot.slane %v119, 4
    %v122 = vshll.u32 %v64, 16
    %v124 = vrot.slane %v122, 5
    %v125 = vsel %vm77, %v120, %v124
    %v126 = vshrl.u32 %v64, 16
    %v128 = vrot.slane %v126, 4
    %v129 = vor.u32 %v128, %v124
    %v130 = vrot.slane %v129, 4
    %v132 = vshll.u32 %v65, 16
    %v134 = vrot.slane %v132, 5
    %v135 = vsel %vm77, %v130, %v134
    %v136 = vshrl.u32 %v65, 16
    %v138 = vrot.slane %v136, 4
    %v139 = vor.u32 %v138, %v134
    %v140 = vrot.slane %v139, 4
    %v142 = vshll.u32 %v66, 16
    %v144 = vrot.slane %v142, 5
    %v145 = vsel %vm77, %v140, %v144
    %s146 = scalar_lea.vmem [#allocation2], 64
    %v147 = vld [vmem:[%s146] sm:$0xff]
    %v148 = vld [vmem:[%s146 + $0x8] sm:$0xff]
    %v149 = vld [vmem:[%s146 + $0x10] sm:$0xff]
    %v150 = vld [vmem:[%s146 + $0x18] sm:$0xff]
    %v151 = vld [vmem:[%s146 + $0x20] sm:$0xff]
    %v152 = vld [vmem:[%s146 + $0x28] sm:$0xff]
    %v153 = vld [vmem:[%s146 + $0x30] sm:$0xff]
    %v154 = vld [vmem:[%s146 + $0x38] sm:$0xff]
    %v155 = vunpack.c.l.b16 %v91
    %v156 = vunpack.c.l.b16 %v101
    %v157 = vunpack.c.l.b16 %v111
    %v158 = vunpack.c.l.b16 %v125
    %v159 = vunpack.c.l.b16 %v135
    %v160 = vunpack.c.l.b16 %v145
    %v161 = vpack.c.b16 %v156, %v155
    %v162 = vpack.c.b16 %v158, %v157
    %v163 = vpack.c.b16 %v160, %v159
    %v172 = vunpack.c.l.b16 %v147
    %v173 = vunpack.c.h.b16 %v147
    %v174 = vunpack.c.l.b16 %v148
    %v175 = vunpack.c.h.b16 %v148
    %v176 = vunpack.c.l.b16 %v149
    %v177 = vunpack.c.h.b16 %v149
    %v178 = vunpack.c.l.b16 %v150
    %v179 = vunpack.c.h.b16 %v150
    %v180 = vunpack.c.l.b16 %v151
    %v181 = vunpack.c.h.b16 %v151
    %v182 = vunpack.c.l.b16 %v152
    %v183 = vunpack.c.h.b16 %v152
    %v184 = vunpack.c.l.b16 %v153
    %v185 = vunpack.c.h.b16 %v153
    %v186 = vunpack.c.l.b16 %v154
    %v187 = vunpack.c.h.b16 %v154
    %v188 = vpack.c.b16 %v176, %v172
    %v189 = vpack.c.b16 %v177, %v173
    %v190 = vpack.c.b16 %v178, %v174
    %v191 = vpack.c.b16 %v179, %v175
    %v192 = vpack.c.b16 %v184, %v180
    %v193 = vpack.c.b16 %v185, %v181
    %v194 = vpack.c.b16 %v186, %v182
    %v195 = vpack.c.b16 %v187, %v183
    %vm204 = vcmask 261120
    %v206 = vsel %vm204, %v161, 0
    %v209 = vsel %vm204, %v162, 0
    %v212 = vsel %vm204, %v163, 0
    %214 = vmatprep.subr.bf16.mxu0 0
    %215 = vmatpush1.bf16.msra.mxu0 0
    %216 = vmatprep.subr.bf16.mxu0 0
    %217 = vmatpush1.bf16.msra.mxu0 0
    %218 = vmatprep.subr.bf16.mxu0 0
    %219 = vmatpush1.bf16.msra.mxu0 0
    %220 = vmatprep.subr.bf16.mxu0 0
    %221 = vmatpush1.bf16.msra.mxu0 0
    %222 = vmatprep.subr.bf16.mxu0 0
    %223 = vmatpush1.bf16.msra.mxu0 0
    %224 = vmatprep.subr.bf16.mxu0 0
    %225 = vmatpush1.bf16.msra.mxu0 0
    %226 = vmatprep.subr.bf16.mxu0 %v193
    %227 = vmatpush1.bf16.msra.mxu0 %v192
    %228 = vmatprep.subr.bf16.mxu0 %v189
    %229 = vmatpush1.bf16.msra.mxu0 %v188
    %230 = vmatprep.subr.bf16.mxu0 0
    %231 = vmatpush2.bf16.msra.mxu0 0
    %232 = vmatprep.subr.bf16.mxu0 0
    %233 = vmatpush2.bf16.msra.mxu0 0
    %234 = vmatprep.subr.bf16.mxu0 0
    %235 = vmatpush2.bf16.msra.mxu0 0
    %236 = vmatprep.subr.bf16.mxu0 0
    %237 = vmatpush2.bf16.msra.mxu0 0
    %238 = vmatprep.subr.bf16.mxu0 0
    %239 = vmatpush2.bf16.msra.mxu0 0
    %240 = vmatprep.subr.bf16.mxu0 0
    %241 = vmatpush2.bf16.msra.mxu0 0
    %242 = vmatprep.subr.bf16.mxu0 0
    %243 = vmatpush2.bf16.msra.mxu0 0
    %244 = vmatprep.subr.bf16.mxu0 0
    %245 = vmatpush2.bf16.msra.mxu0 0
    %246 = vmatprep.mubr.bf16.mxu0 0
    %247 = vmatmul.mubr.bf16.gmra.mxu0 %v206
    %v248 = vpop.f32.mrf.mxu0
    %v249 = vadd.f32 0.0, %v248
    %v250 = vpop.f32.mrf.mxu0
    %v251 = vadd.f32 0.0, %v250
    %v252 = vpop.f32.mrf.mxu0
    %v253 = vadd.f32 0.0, %v252
    %v254 = vpop.f32.mrf.mxu0
    %v255 = vadd.f32 0.0, %v254
    %256 = vmatprep.mubr.bf16.mxu0 0
    %257 = vmatmul.mubr.bf16.gmra.mxu0 %v209
    %v258 = vpop.f32.mrf.mxu0
    %v259 = vadd.f32 0.0, %v258
    %v260 = vpop.f32.mrf.mxu0
    %v261 = vadd.f32 0.0, %v260
    %v262 = vpop.f32.mrf.mxu0
    %v263 = vadd.f32 0.0, %v262
    %v264 = vpop.f32.mrf.mxu0
    %v265 = vadd.f32 0.0, %v264
    %266 = vmatprep.mubr.bf16.mxu0 0
    %267 = vmatmul.mubr.bf16.gmra.mxu0 %v212
    %v268 = vpop.f32.mrf.mxu0
    %v269 = vadd.f32 0.0, %v268
    %v270 = vpop.f32.mrf.mxu0
    %v271 = vadd.f32 0.0, %v270
    %v272 = vpop.f32.mrf.mxu0
    %v273 = vadd.f32 0.0, %v272
    %v274 = vpop.f32.mrf.mxu0
    %v275 = vadd.f32 0.0, %v274
    %276 = vdwg.mxu0
    %277 = vmatprep.subr.bf16.mxu0 0
    %278 = vmatpush1.bf16.msra.mxu0 0
    %279 = vmatprep.subr.bf16.mxu0 0
    %280 = vmatpush1.bf16.msra.mxu0 0
    %281 = vmatprep.subr.bf16.mxu0 0
    %282 = vmatpush1.bf16.msra.mxu0 0
    %283 = vmatprep.subr.bf16.mxu0 0
    %284 = vmatpush1.bf16.msra.mxu0 0
    %285 = vmatprep.subr.bf16.mxu0 0
    %286 = vmatpush1.bf16.msra.mxu0 0
    %287 = vmatprep.subr.bf16.mxu0 0
    %288 = vmatpush1.bf16.msra.mxu0 0
    %289 = vmatprep.subr.bf16.mxu0 %v195
    %290 = vmatpush1.bf16.msra.mxu0 %v194
    %291 = vmatprep.subr.bf16.mxu0 %v191
    %292 = vmatpush1.bf16.msra.mxu0 %v190
    %293 = vmatprep.subr.bf16.mxu0 0
    %294 = vmatpush2.bf16.msra.mxu0 0
    %295 = vmatprep.subr.bf16.mxu0 0
    %296 = vmatpush2.bf16.msra.mxu0 0
    %297 = vmatprep.subr.bf16.mxu0 0
    %298 = vmatpush2.bf16.msra.mxu0 0
    %299 = vmatprep.subr.bf16.mxu0 0
    %300 = vmatpush2.bf16.msra.mxu0 0
    %301 = vmatprep.subr.bf16.mxu0 0
    %302 = vmatpush2.bf16.msra.mxu0 0
    %303 = vmatprep.subr.bf16.mxu0 0
    %304 = vmatpush2.bf16.msra.mxu0 0
    %305 = vmatprep.subr.bf16.mxu0 0
    %306 = vmatpush2.bf16.msra.mxu0 0
    %307 = vmatprep.subr.bf16.mxu0 0
    %308 = vmatpush2.bf16.msra.mxu0 0
    %309 = vmatprep.mubr.bf16.mxu0 0
    %310 = vmatmul.mubr.bf16.gmra.mxu0 %v206
    %v311 = vpop.f32.mrf.mxu0
    %v312 = vadd.f32 0.0, %v311
    %v313 = vpop.f32.mrf.mxu0
    %v314 = vadd.f32 0.0, %v313
    %v315 = vpop.f32.mrf.mxu0
    %v316 = vadd.f32 0.0, %v315
    %v317 = vpop.f32.mrf.mxu0
    %v318 = vadd.f32 0.0, %v317
    %319 = vmatprep.mubr.bf16.mxu0 0
    %320 = vmatmul.mubr.bf16.gmra.mxu0 %v209
    %v321 = vpop.f32.mrf.mxu0
    %v322 = vadd.f32 0.0, %v321
    %v323 = vpop.f32.mrf.mxu0
    %v324 = vadd.f32 0.0, %v323
    %v325 = vpop.f32.mrf.mxu0
    %v326 = vadd.f32 0.0, %v325
    %v327 = vpop.f32.mrf.mxu0
    %v328 = vadd.f32 0.0, %v327
    %329 = vmatprep.mubr.bf16.mxu0 0
    %330 = vmatmul.mubr.bf16.gmra.mxu0 %v212
    %v331 = vpop.f32.mrf.mxu0
    %v332 = vadd.f32 0.0, %v331
    %v333 = vpop.f32.mrf.mxu0
    %v334 = vadd.f32 0.0, %v333
    %v335 = vpop.f32.mrf.mxu0
    %v336 = vadd.f32 0.0, %v335
    %v337 = vpop.f32.mrf.mxu0
    %v338 = vadd.f32 0.0, %v337
    %339 = vdwg.mxu0
    %v346 = vunpack.c.l.b16 %v59
    %v347 = vunpack.c.l.b16 %v60
    %v348 = vunpack.c.l.b16 %v61
    %v349 = vunpack.c.l.b16 %v63
    %v350 = vunpack.c.l.b16 %v64
    %v351 = vunpack.c.l.b16 %v65
    %v352 = vpack.c.b16 %v347, %v346
    %v353 = vpack.c.b16 %v349, %v348
    %v354 = vpack.c.b16 %v351, %v350
    %v363 = vunpack.c.l.b16 %v67
    %v364 = vunpack.c.h.b16 %v67
    %v365 = vunpack.c.l.b16 %v68
    %v366 = vunpack.c.h.b16 %v68
    %v367 = vunpack.c.l.b16 %v69
    %v368 = vunpack.c.h.b16 %v69
    %v369 = vunpack.c.l.b16 %v70
    %v370 = vunpack.c.h.b16 %v70
    %v371 = vunpack.c.l.b16 %v71
    %v372 = vunpack.c.h.b16 %v71
    %v373 = vunpack.c.l.b16 %v72
    %v374 = vunpack.c.h.b16 %v72
    %v375 = vunpack.c.l.b16 %v73
    %v376 = vunpack.c.h.b16 %v73
    %v377 = vunpack.c.l.b16 %v74
    %v378 = vunpack.c.h.b16 %v74
    %v379 = vpack.c.b16 %v367, %v363
    %v380 = vpack.c.b16 %v368, %v364
    %v381 = vpack.c.b16 %v369, %v365
    %v382 = vpack.c.b16 %v370, %v366
    %v383 = vpack.c.b16 %v375, %v371
    %v384 = vpack.c.b16 %v376, %v372
    %v385 = vpack.c.b16 %v377, %v373
    %v386 = vpack.c.b16 %v378, %v374
    %v396 = vsel %vm204, %v352, 0
    %v399 = vsel %vm204, %v353, 0
    %v402 = vsel %vm204, %v354, 0
    %404 = vmatprep.subr.bf16.mxu0 0
    %405 = vmatpush1.bf16.msra.mxu0 0
    %406 = vmatprep.subr.bf16.mxu0 0
    %407 = vmatpush1.bf16.msra.mxu0 0
    %408 = vmatprep.subr.bf16.mxu0 0
    %409 = vmatpush1.bf16.msra.mxu0 0
    %410 = vmatprep.subr.bf16.mxu0 0
    %411 = vmatpush1.bf16.msra.mxu0 0
    %412 = vmatprep.subr.bf16.mxu0 0
    %413 = vmatpush1.bf16.msra.mxu0 0
    %414 = vmatprep.subr.bf16.mxu0 0
    %415 = vmatpush1.bf16.msra.mxu0 0
    %416 = vmatprep.subr.bf16.mxu0 %v384
    %417 = vmatpush1.bf16.msra.mxu0 %v383
    %418 = vmatprep.subr.bf16.mxu0 %v380
    %419 = vmatpush1.bf16.msra.mxu0 %v379
    %420 = vmatprep.subr.bf16.mxu0 0
    %421 = vmatpush2.bf16.msra.mxu0 0
    %422 = vmatprep.subr.bf16.mxu0 0
    %423 = vmatpush2.bf16.msra.mxu0 0
    %424 = vmatprep.subr.bf16.mxu0 0
    %425 = vmatpush2.bf16.msra.mxu0 0
    %426 = vmatprep.subr.bf16.mxu0 0
    %427 = vmatpush2.bf16.msra.mxu0 0
    %428 = vmatprep.subr.bf16.mxu0 0
    %429 = vmatpush2.bf16.msra.mxu0 0
    %430 = vmatprep.subr.bf16.mxu0 0
    %431 = vmatpush2.bf16.msra.mxu0 0
    %432 = vmatprep.subr.bf16.mxu0 0
    %433 = vmatpush2.bf16.msra.mxu0 0
    %434 = vmatprep.subr.bf16.mxu0 0
    %435 = vmatpush2.bf16.msra.mxu0 0
    %436 = vmatprep.mubr.bf16.mxu0 0
    %437 = vmatmul.mubr.bf16.gmra.mxu0 %v396
    %v438 = vpop.f32.mrf.mxu0
    %v439 = vadd.f32 %v249, %v438
    %v440 = vpop.f32.mrf.mxu0
    %v441 = vadd.f32 %v251, %v440
    %v442 = vpop.f32.mrf.mxu0
    %v443 = vadd.f32 %v253, %v442
    %v444 = vpop.f32.mrf.mxu0
    %v445 = vadd.f32 %v255, %v444
    %446 = vmatprep.mubr.bf16.mxu0 0
    %447 = vmatmul.mubr.bf16.gmra.mxu0 %v399
    %v448 = vpop.f32.mrf.mxu0
    %v449 = vadd.f32 %v259, %v448
    %v450 = vpop.f32.mrf.mxu0
    %v451 = vadd.f32 %v261, %v450
    %v452 = vpop.f32.mrf.mxu0
    %v453 = vadd.f32 %v263, %v452
    %v454 = vpop.f32.mrf.mxu0
    %v455 = vadd.f32 %v265, %v454
    %456 = vmatprep.mubr.bf16.mxu0 0
    %457 = vmatmul.mubr.bf16.gmra.mxu0 %v402
    %v458 = vpop.f32.mrf.mxu0
    %v459 = vadd.f32 %v269, %v458
    %v460 = vpop.f32.mrf.mxu0
    %v461 = vadd.f32 %v271, %v460
    %v462 = vpop.f32.mrf.mxu0
    %v463 = vadd.f32 %v273, %v462
    %v464 = vpop.f32.mrf.mxu0
    %v465 = vadd.f32 %v275, %v464
    %466 = vdwg.mxu0
    %467 = vmatprep.subr.bf16.mxu0 0
    %468 = vmatpush1.bf16.msra.mxu0 0
    %469 = vmatprep.subr.bf16.mxu0 0
    %470 = vmatpush1.bf16.msra.mxu0 0
    %471 = vmatprep.subr.bf16.mxu0 0
    %472 = vmatpush1.bf16.msra.mxu0 0
    %473 = vmatprep.subr.bf16.mxu0 0
    %474 = vmatpush1.bf16.msra.mxu0 0
    %475 = vmatprep.subr.bf16.mxu0 0
    %476 = vmatpush1.bf16.msra.mxu0 0
    %477 = vmatprep.subr.bf16.mxu0 0
    %478 = vmatpush1.bf16.msra.mxu0 0
    %479 = vmatprep.subr.bf16.mxu0 %v386
    %480 = vmatpush1.bf16.msra.mxu0 %v385
    %481 = vmatprep.subr.bf16.mxu0 %v382
    %482 = vmatpush1.bf16.msra.mxu0 %v381
    %483 = vmatprep.subr.bf16.mxu0 0
    %484 = vmatpush2.bf16.msra.mxu0 0
    %485 = vmatprep.subr.bf16.mxu0 0
    %486 = vmatpush2.bf16.msra.mxu0 0
    %487 = vmatprep.subr.bf16.mxu0 0
    %488 = vmatpush2.bf16.msra.mxu0 0
    %489 = vmatprep.subr.bf16.mxu0 0
    %490 = vmatpush2.bf16.msra.mxu0 0
    %491 = vmatprep.subr.bf16.mxu0 0
    %492 = vmatpush2.bf16.msra.mxu0 0
    %493 = vmatprep.subr.bf16.mxu0 0
    %494 = vmatpush2.bf16.msra.mxu0 0
    %495 = vmatprep.subr.bf16.mxu0 0
    %496 = vmatpush2.bf16.msra.mxu0 0
    %497 = vmatprep.subr.bf16.mxu0 0
    %498 = vmatpush2.bf16.msra.mxu0 0
    %499 = vmatprep.mubr.bf16.mxu0 0
    %500 = vmatmul.mubr.bf16.gmra.mxu0 %v396
    %v501 = vpop.f32.mrf.mxu0
    %v502 = vadd.f32 %v312, %v501
    %v503 = vpop.f32.mrf.mxu0
    %v504 = vadd.f32 %v314, %v503
    %v505 = vpop.f32.mrf.mxu0
    %v506 = vadd.f32 %v316, %v505
    %v507 = vpop.f32.mrf.mxu0
    %v508 = vadd.f32 %v318, %v507
    %509 = vmatprep.mubr.bf16.mxu0 0
    %510 = vmatmul.mubr.bf16.gmra.mxu0 %v399
    %v511 = vpop.f32.mrf.mxu0
    %v512 = vadd.f32 %v322, %v511
    %v513 = vpop.f32.mrf.mxu0
    %v514 = vadd.f32 %v324, %v513
    %v515 = vpop.f32.mrf.mxu0
    %v516 = vadd.f32 %v326, %v515
    %v517 = vpop.f32.mrf.mxu0
    %v518 = vadd.f32 %v328, %v517
    %519 = vmatprep.mubr.bf16.mxu0 0
    %520 = vmatmul.mubr.bf16.gmra.mxu0 %v402
    %v521 = vpop.f32.mrf.mxu0
    %v522 = vadd.f32 %v332, %v521
    %v523 = vpop.f32.mrf.mxu0
    %v524 = vadd.f32 %v334, %v523
    %v525 = vpop.f32.mrf.mxu0
    %v526 = vadd.f32 %v336, %v525
    %v527 = vpop.f32.mrf.mxu0
    %v528 = vadd.f32 %v338, %v527
    %529 = vdwg.mxu0
    %vm532 = vcmask 1042432
    %vm533 = vcmask 1046532
    %vm534 = vmor %vm532, %vm533
    %v535 = vrot.slane %v59, 5
    %v536 = vrot.slane %v535, 4
    %v537 = vrot.slane %v60, 5
    %v538 = vsel %vm534, %v536, %v537
    %v539 = vrot.slane %v537, 4
    %v540 = vrot.slane %v61, 5
    %v541 = vsel %vm534, %v539, %v540
    %v542 = vrot.slane %v540, 4
    %v543 = vrot.slane %v62, 5
    %v544 = vsel %vm534, %v542, %v543
    %v545 = vrot.slane %v63, 5
    %v546 = vrot.slane %v545, 4
    %v547 = vrot.slane %v64, 5
    %v548 = vsel %vm534, %v546, %v547
    %v549 = vrot.slane %v547, 4
    %v550 = vrot.slane %v65, 5
    %v551 = vsel %vm534, %v549, %v550
    %v552 = vrot.slane %v550, 4
    %v553 = vrot.slane %v66, 5
    %v554 = vsel %vm534, %v552, %v553
    %s555 = scalar_lea.vmem [#allocation2], 128
    %v556 = vld [vmem:[%s555] sm:$0xff]
    %v557 = vld [vmem:[%s555 + $0x8] sm:$0xff]
    %v558 = vld [vmem:[%s555 + $0x10] sm:$0xff]
    %v559 = vld [vmem:[%s555 + $0x18] sm:$0xff]
    %v560 = vld [vmem:[%s555 + $0x20] sm:$0xff]
    %v561 = vld [vmem:[%s555 + $0x28] sm:$0xff]
    %v562 = vld [vmem:[%s555 + $0x30] sm:$0xff]
    %v563 = vld [vmem:[%s555 + $0x38] sm:$0xff]
    %v564 = vunpack.c.l.b16 %v538
    %v565 = vunpack.c.l.b16 %v541
    %v566 = vunpack.c.l.b16 %v544
    %v567 = vunpack.c.l.b16 %v548
    %v568 = vunpack.c.l.b16 %v551
    %v569 = vunpack.c.l.b16 %v554
    %v570 = vpack.c.b16 %v565, %v564
    %v571 = vpack.c.b16 %v567, %v566
    %v572 = vpack.c.b16 %v569, %v568
    %v581 = vunpack.c.l.b16 %v556
    %v582 = vunpack.c.h.b16 %v556
    %v583 = vunpack.c.l.b16 %v557
    %v584 = vunpack.c.h.b16 %v557
    %v585 = vunpack.c.l.b16 %v558
    %v586 = vunpack.c.h.b16 %v558
    %v587 = vunpack.c.l.b16 %v559
    %v588 = vunpack.c.h.b16 %v559
    %v589 = vunpack.c.l.b16 %v560
    %v590 = vunpack.c.h.b16 %v560
    %v591 = vunpack.c.l.b16 %v561
    %v592 = vunpack.c.h.b16 %v561
    %v593 = vunpack.c.l.b16 %v562
    %v594 = vunpack.c.h.b16 %v562
    %v595 = vunpack.c.l.b16 %v563
    %v596 = vunpack.c.h.b16 %v563
    %v597 = vpack.c.b16 %v585, %v581
    %v598 = vpack.c.b16 %v586, %v582
    %v599 = vpack.c.b16 %v587, %v583
    %v600 = vpack.c.b16 %v588, %v584
    %v601 = vpack.c.b16 %v593, %v589
    %v602 = vpack.c.b16 %v594, %v590
    %v603 = vpack.c.b16 %v595, %v591
    %v604 = vpack.c.b16 %v596, %v592
    %v614 = vsel %vm204, %v570, 0
    %v617 = vsel %vm204, %v571, 0
    %v620 = vsel %vm204, %v572, 0
    %622 = vmatprep.subr.bf16.mxu0 0
    %623 = vmatpush1.bf16.msra.mxu0 0
    %624 = vmatprep.subr.bf16.mxu0 0
    %625 = vmatpush1.bf16.msra.mxu0 0
    %626 = vmatprep.subr.bf16.mxu0 0
    %627 = vmatpush1.bf16.msra.mxu0 0
    %628 = vmatprep.subr.bf16.mxu0 0
    %629 = vmatpush1.bf16.msra.mxu0 0
    %630 = vmatprep.subr.bf16.mxu0 0
    %631 = vmatpush1.bf16.msra.mxu0 0
    %632 = vmatprep.subr.bf16.mxu0 0
    %633 = vmatpush1.bf16.msra.mxu0 0
    %634 = vmatprep.subr.bf16.mxu0 %v602
    %635 = vmatpush1.bf16.msra.mxu0 %v601
    %636 = vmatprep.subr.bf16.mxu0 %v598
    %637 = vmatpush1.bf16.msra.mxu0 %v597
    %638 = vmatprep.subr.bf16.mxu0 0
    %639 = vmatpush2.bf16.msra.mxu0 0
    %640 = vmatprep.subr.bf16.mxu0 0
    %641 = vmatpush2.bf16.msra.mxu0 0
    %642 = vmatprep.subr.bf16.mxu0 0
    %643 = vmatpush2.bf16.msra.mxu0 0
    %644 = vmatprep.subr.bf16.mxu0 0
    %645 = vmatpush2.bf16.msra.mxu0 0
    %646 = vmatprep.subr.bf16.mxu0 0
    %647 = vmatpush2.bf16.msra.mxu0 0
    %648 = vmatprep.subr.bf16.mxu0 0
    %649 = vmatpush2.bf16.msra.mxu0 0
    %650 = vmatprep.subr.bf16.mxu0 0
    %651 = vmatpush2.bf16.msra.mxu0 0
    %652 = vmatprep.subr.bf16.mxu0 0
    %653 = vmatpush2.bf16.msra.mxu0 0
    %654 = vmatprep.mubr.bf16.mxu0 0
    %655 = vmatmul.mubr.bf16.gmra.mxu0 %v614
    %v656 = vpop.f32.mrf.mxu0
    %v657 = vadd.f32 0.0, %v656
    %v658 = vpop.f32.mrf.mxu0
    %v659 = vadd.f32 0.0, %v658
    %v660 = vpop.f32.mrf.mxu0
    %v661 = vadd.f32 0.0, %v660
    %v662 = vpop.f32.mrf.mxu0
    %v663 = vadd.f32 0.0, %v662
    %664 = vmatprep.mubr.bf16.mxu0 0
    %665 = vmatmul.mubr.bf16.gmra.mxu0 %v617
    %v666 = vpop.f32.mrf.mxu0
    %v667 = vadd.f32 0.0, %v666
    %v668 = vpop.f32.mrf.mxu0
    %v669 = vadd.f32 0.0, %v668
    %v670 = vpop.f32.mrf.mxu0
    %v671 = vadd.f32 0.0, %v670
    %v672 = vpop.f32.mrf.mxu0
    %v673 = vadd.f32 0.0, %v672
    %674 = vmatprep.mubr.bf16.mxu0 0
    %675 = vmatmul.mubr.bf16.gmra.mxu0 %v620
    %v676 = vpop.f32.mrf.mxu0
    %v677 = vadd.f32 0.0, %v676
    %v678 = vpop.f32.mrf.mxu0
    %v679 = vadd.f32 0.0, %v678
    %v680 = vpop.f32.mrf.mxu0
    %v681 = vadd.f32 0.0, %v680
    %v682 = vpop.f32.mrf.mxu0
    %v683 = vadd.f32 0.0, %v682
    %684 = vdwg.mxu0
    %685 = vmatprep.subr.bf16.mxu0 0
    %686 = vmatpush1.bf16.msra.mxu0 0
    %687 = vmatprep.subr.bf16.mxu0 0
    %688 = vmatpush1.bf16.msra.mxu0 0
    %689 = vmatprep.subr.bf16.mxu0 0
    %690 = vmatpush1.bf16.msra.mxu0 0
    %691 = vmatprep.subr.bf16.mxu0 0
    %692 = vmatpush1.bf16.msra.mxu0 0
    %693 = vmatprep.subr.bf16.mxu0 0
    %694 = vmatpush1.bf16.msra.mxu0 0
    %695 = vmatprep.subr.bf16.mxu0 0
    %696 = vmatpush1.bf16.msra.mxu0 0
    %697 = vmatprep.subr.bf16.mxu0 %v604
    %698 = vmatpush1.bf16.msra.mxu0 %v603
    %699 = vmatprep.subr.bf16.mxu0 %v600
    %700 = vmatpush1.bf16.msra.mxu0 %v599
    %701 = vmatprep.subr.bf16.mxu0 0
    %702 = vmatpush2.bf16.msra.mxu0 0
    %703 = vmatprep.subr.bf16.mxu0 0
    %704 = vmatpush2.bf16.msra.mxu0 0
    %705 = vmatprep.subr.bf16.mxu0 0
    %706 = vmatpush2.bf16.msra.mxu0 0
    %707 = vmatprep.subr.bf16.mxu0 0
    %708 = vmatpush2.bf16.msra.mxu0 0
    %709 = vmatprep.subr.bf16.mxu0 0
    %710 = vmatpush2.bf16.msra.mxu0 0
    %711 = vmatprep.subr.bf16.mxu0 0
    %712 = vmatpush2.bf16.msra.mxu0 0
    %713 = vmatprep.subr.bf16.mxu0 0
    %714 = vmatpush2.bf16.msra.mxu0 0
    %715 = vmatprep.subr.bf16.mxu0 0
    %716 = vmatpush2.bf16.msra.mxu0 0
    %717 = vmatprep.mubr.bf16.mxu0 0
    %718 = vmatmul.mubr.bf16.gmra.mxu0 %v614
    %v719 = vpop.f32.mrf.mxu0
    %v720 = vadd.f32 0.0, %v719
    %v721 = vpop.f32.mrf.mxu0
    %v722 = vadd.f32 0.0, %v721
    %v723 = vpop.f32.mrf.mxu0
    %v724 = vadd.f32 0.0, %v723
    %v725 = vpop.f32.mrf.mxu0
    %v726 = vadd.f32 0.0, %v725
    %727 = vmatprep.mubr.bf16.mxu0 0
    %728 = vmatmul.mubr.bf16.gmra.mxu0 %v617
    %v729 = vpop.f32.mrf.mxu0
    %v730 = vadd.f32 0.0, %v729
    %v731 = vpop.f32.mrf.mxu0
    %v732 = vadd.f32 0.0, %v731
    %v733 = vpop.f32.mrf.mxu0
    %v734 = vadd.f32 0.0, %v733
    %v735 = vpop.f32.mrf.mxu0
    %v736 = vadd.f32 0.0, %v735
    %737 = vmatprep.mubr.bf16.mxu0 0
    %738 = vmatmul.mubr.bf16.gmra.mxu0 %v620
    %v739 = vpop.f32.mrf.mxu0
    %v740 = vadd.f32 0.0, %v739
    %v741 = vpop.f32.mrf.mxu0
    %v742 = vadd.f32 0.0, %v741
    %v743 = vpop.f32.mrf.mxu0
    %v744 = vadd.f32 0.0, %v743
    %v745 = vpop.f32.mrf.mxu0
    %v746 = vadd.f32 0.0, %v745
    %747 = vdwg.mxu0
    %v748 = vadd.f32 %v439, %v657
    %v749 = vadd.f32 %v441, %v659
    %v750 = vadd.f32 %v502, %v720
    %v751 = vadd.f32 %v504, %v722
    %v752 = vadd.f32 %v443, %v661
    %v753 = vadd.f32 %v445, %v663
    %v754 = vadd.f32 %v506, %v724
    %v755 = vadd.f32 %v508, %v726
    %v756 = vadd.f32 %v449, %v667
    %v757 = vadd.f32 %v451, %v669
    %v758 = vadd.f32 %v512, %v730
    %v759 = vadd.f32 %v514, %v732
    %v760 = vadd.f32 %v453, %v671
    %v761 = vadd.f32 %v455, %v673
    %v762 = vadd.f32 %v516, %v734
    %v763 = vadd.f32 %v518, %v736
    %v764 = vadd.f32 %v459, %v677
    %v765 = vadd.f32 %v461, %v679
    %v766 = vadd.f32 %v522, %v740
    %v767 = vadd.f32 %v524, %v742
    %v768 = vadd.f32 %v463, %v681
    %v769 = vadd.f32 %v465, %v683
    %v770 = vadd.f32 %v526, %v744
    %v771 = vadd.f32 %v528, %v746
    %vm772 = vsmask.f32 2304
    %vm773 = vsmask.f32 6416
    %vm774 = vmor %vm772, %vm773
    %v775 = vrot.slane %v79, 5
    %v776 = vrot.slane %v82, 6
    %v777 = vor.u32 %v775, %v776
    %v778 = vrot.slane %v777, 4
    %v779 = vrot.slane %v92, 5
    %v780 = vrot.slane %v88, 6
    %v781 = vor.u32 %v779, %v780
    %v782 = vsel %vm774, %v778, %v781
    %v783 = vrot.slane %v781, 4
    %v784 = vrot.slane %v102, 5
    %v785 = vrot.slane %v98, 6
    %v786 = vor.u32 %v784, %v785
    %v787 = vsel %vm774, %v783, %v786
    %v788 = vrot.slane %v786, 4
    %v789 = vshrl.u32 %v62, 16
    %v791 = vrot.slane %v789, 5
    %v792 = vrot.slane %v108, 6
    %v793 = vor.u32 %v791, %v792
    %v794 = vsel %vm774, %v788, %v793
    %v795 = vrot.slane %v113, 5
    %v796 = vrot.slane %v116, 6
    %v797 = vor.u32 %v795, %v796
    %v798 = vrot.slane %v797, 4
    %v799 = vrot.slane %v126, 5
    %v800 = vrot.slane %v122, 6
    %v801 = vor.u32 %v799, %v800
    %v802 = vsel %vm774, %v798, %v801
    %v803 = vrot.slane %v801, 4
    %v804 = vrot.slane %v136, 5
    %v805 = vrot.slane %v132, 6
    %v806 = vor.u32 %v804, %v805
    %v807 = vsel %vm774, %v803, %v806
    %v808 = vrot.slane %v806, 4
    %v809 = vshrl.u32 %v66, 16
    %v811 = vrot.slane %v809, 5
    %v812 = vrot.slane %v142, 6
    %v813 = vor.u32 %v811, %v812
    %v814 = vsel %vm774, %v808, %v813
    %s815 = scalar_lea.vmem [#allocation2], 192
    %v816 = vld [vmem:[%s815] sm:$0xff]
    %v817 = vld [vmem:[%s815 + $0x8] sm:$0xff]
    %v818 = vld [vmem:[%s815 + $0x10] sm:$0xff]
    %v819 = vld [vmem:[%s815 + $0x18] sm:$0xff]
    %v820 = vld [vmem:[%s815 + $0x20] sm:$0xff]
    %v821 = vld [vmem:[%s815 + $0x28] sm:$0xff]
    %v822 = vld [vmem:[%s815 + $0x30] sm:$0xff]
    %v823 = vld [vmem:[%s815 + $0x38] sm:$0xff]
    %v824 = vunpack.c.l.b16 %v782
    %v825 = vunpack.c.l.b16 %v787
    %v826 = vunpack.c.l.b16 %v794
    %v827 = vunpack.c.l.b16 %v802
    %v828 = vunpack.c.l.b16 %v807
    %v829 = vunpack.c.l.b16 %v814
    %v830 = vpack.c.b16 %v825, %v824
    %v831 = vpack.c.b16 %v827, %v826
    %v832 = vpack.c.b16 %v829, %v828
    %v841 = vunpack.c.l.b16 %v816
    %v842 = vunpack.c.h.b16 %v816
    %v843 = vunpack.c.l.b16 %v817
    %v844 = vunpack.c.h.b16 %v817
    %v845 = vunpack.c.l.b16 %v818
    %v846 = vunpack.c.h.b16 %v818
    %v847 = vunpack.c.l.b16 %v819
    %v848 = vunpack.c.h.b16 %v819
    %v849 = vunpack.c.l.b16 %v820
    %v850 = vunpack.c.h.b16 %v820
    %v851 = vunpack.c.l.b16 %v821
    %v852 = vunpack.c.h.b16 %v821
    %v853 = vunpack.c.l.b16 %v822
    %v854 = vunpack.c.h.b16 %v822
    %v855 = vunpack.c.l.b16 %v823
    %v856 = vunpack.c.h.b16 %v823
    %v857 = vpack.c.b16 %v845, %v841
    %v858 = vpack.c.b16 %v846, %v842
    %v859 = vpack.c.b16 %v847, %v843
    %v860 = vpack.c.b16 %v848, %v844
    %v861 = vpack.c.b16 %v853, %v849
    %v862 = vpack.c.b16 %v854, %v850
    %v863 = vpack.c.b16 %v855, %v851
    %v864 = vpack.c.b16 %v856, %v852
    %v874 = vsel %vm204, %v830, 0
    %v877 = vsel %vm204, %v831, 0
    %v880 = vsel %vm204, %v832, 0
    %882 = vmatprep.subr.bf16.mxu0 0
    %883 = vmatpush1.bf16.msra.mxu0 0
    %884 = vmatprep.subr.bf16.mxu0 0
    %885 = vmatpush1.bf16.msra.mxu0 0
    %886 = vmatprep.subr.bf16.mxu0 0
    %887 = vmatpush1.bf16.msra.mxu0 0
    %888 = vmatprep.subr.bf16.mxu0 0
    %889 = vmatpush1.bf16.msra.mxu0 0
    %890 = vmatprep.subr.bf16.mxu0 0
    %891 = vmatpush1.bf16.msra.mxu0 0
    %892 = vmatprep.subr.bf16.mxu0 0
    %893 = vmatpush1.bf16.msra.mxu0 0
    %894 = vmatprep.subr.bf16.mxu0 %v862
    %895 = vmatpush1.bf16.msra.mxu0 %v861
    %896 = vmatprep.subr.bf16.mxu0 %v858
    %897 = vmatpush1.bf16.msra.mxu0 %v857
    %898 = vmatprep.subr.bf16.mxu0 0
    %899 = vmatpush2.bf16.msra.mxu0 0
    %900 = vmatprep.subr.bf16.mxu0 0
    %901 = vmatpush2.bf16.msra.mxu0 0
    %902 = vmatprep.subr.bf16.mxu0 0
    %903 = vmatpush2.bf16.msra.mxu0 0
    %904 = vmatprep.subr.bf16.mxu0 0
    %905 = vmatpush2.bf16.msra.mxu0 0
    %906 = vmatprep.subr.bf16.mxu0 0
    %907 = vmatpush2.bf16.msra.mxu0 0
    %908 = vmatprep.subr.bf16.mxu0 0
    %909 = vmatpush2.bf16.msra.mxu0 0
    %910 = vmatprep.subr.bf16.mxu0 0
    %911 = vmatpush2.bf16.msra.mxu0 0
    %912 = vmatprep.subr.bf16.mxu0 0
    %913 = vmatpush2.bf16.msra.mxu0 0
    %914 = vmatprep.mubr.bf16.mxu0 0
    %915 = vmatmul.mubr.bf16.gmra.mxu0 %v874
    %v916 = vpop.f32.mrf.mxu0
    %v917 = vadd.f32 0.0, %v916
    %v918 = vpop.f32.mrf.mxu0
    %v919 = vadd.f32 0.0, %v918
    %v920 = vpop.f32.mrf.mxu0
    %v921 = vadd.f32 0.0, %v920
    %v922 = vpop.f32.mrf.mxu0
    %v923 = vadd.f32 0.0, %v922
    %924 = vmatprep.mubr.bf16.mxu0 0
    %925 = vmatmul.mubr.bf16.gmra.mxu0 %v877
    %v926 = vpop.f32.mrf.mxu0
    %v927 = vadd.f32 0.0, %v926
    %v928 = vpop.f32.mrf.mxu0
    %v929 = vadd.f32 0.0, %v928
    %v930 = vpop.f32.mrf.mxu0
    %v931 = vadd.f32 0.0, %v930
    %v932 = vpop.f32.mrf.mxu0
    %v933 = vadd.f32 0.0, %v932
    %934 = vmatprep.mubr.bf16.mxu0 0
    %935 = vmatmul.mubr.bf16.gmra.mxu0 %v880
    %v936 = vpop.f32.mrf.mxu0
    %v937 = vadd.f32 0.0, %v936
    %v938 = vpop.f32.mrf.mxu0
    %v939 = vadd.f32 0.0, %v938
    %v940 = vpop.f32.mrf.mxu0
    %v941 = vadd.f32 0.0, %v940
    %v942 = vpop.f32.mrf.mxu0
    %v943 = vadd.f32 0.0, %v942
    %944 = vdwg.mxu0
    %945 = vmatprep.subr.bf16.mxu0 0
    %946 = vmatpush1.bf16.msra.mxu0 0
    %947 = vmatprep.subr.bf16.mxu0 0
    %948 = vmatpush1.bf16.msra.mxu0 0
    %949 = vmatprep.subr.bf16.mxu0 0
    %950 = vmatpush1.bf16.msra.mxu0 0
    %951 = vmatprep.subr.bf16.mxu0 0
    %952 = vmatpush1.bf16.msra.mxu0 0
    %953 = vmatprep.subr.bf16.mxu0 0
    %954 = vmatpush1.bf16.msra.mxu0 0
    %955 = vmatprep.subr.bf16.mxu0 0
    %956 = vmatpush1.bf16.msra.mxu0 0
    %957 = vmatprep.subr.bf16.mxu0 %v864
    %958 = vmatpush1.bf16.msra.mxu0 %v863
    %959 = vmatprep.subr.bf16.mxu0 %v860
    %960 = vmatpush1.bf16.msra.mxu0 %v859
    %961 = vmatprep.subr.bf16.mxu0 0
    %962 = vmatpush2.bf16.msra.mxu0 0
    %963 = vmatprep.subr.bf16.mxu0 0
    %964 = vmatpush2.bf16.msra.mxu0 0
    %965 = vmatprep.subr.bf16.mxu0 0
    %966 = vmatpush2.bf16.msra.mxu0 0
    %967 = vmatprep.subr.bf16.mxu0 0
    %968 = vmatpush2.bf16.msra.mxu0 0
    %969 = vmatprep.subr.bf16.mxu0 0
    %970 = vmatpush2.bf16.msra.mxu0 0
    %971 = vmatprep.subr.bf16.mxu0 0
    %972 = vmatpush2.bf16.msra.mxu0 0
    %973 = vmatprep.subr.bf16.mxu0 0
    %974 = vmatpush2.bf16.msra.mxu0 0
    %975 = vmatprep.subr.bf16.mxu0 0
    %976 = vmatpush2.bf16.msra.mxu0 0
    %977 = vmatprep.mubr.bf16.mxu0 0
    %978 = vmatmul.mubr.bf16.gmra.mxu0 %v874
    %v979 = vpop.f32.mrf.mxu0
    %v980 = vadd.f32 0.0, %v979
    %v981 = vpop.f32.mrf.mxu0
    %v982 = vadd.f32 0.0, %v981
    %v983 = vpop.f32.mrf.mxu0
    %v984 = vadd.f32 0.0, %v983
    %v985 = vpop.f32.mrf.mxu0
    %v986 = vadd.f32 0.0, %v985
    %987 = vmatprep.mubr.bf16.mxu0 0
    %988 = vmatmul.mubr.bf16.gmra.mxu0 %v877
    %v989 = vpop.f32.mrf.mxu0
    %v990 = vadd.f32 0.0, %v989
    %v991 = vpop.f32.mrf.mxu0
    %v992 = vadd.f32 0.0, %v991
    %v993 = vpop.f32.mrf.mxu0
    %v994 = vadd.f32 0.0, %v993
    %v995 = vpop.f32.mrf.mxu0
    %v996 = vadd.f32 0.0, %v995
    %997 = vmatprep.mubr.bf16.mxu0 0
    %998 = vmatmul.mubr.bf16.gmra.mxu0 %v880
    %v999 = vpop.f32.mrf.mxu0
    %v1000 = vadd.f32 0.0, %v999
    %v1001 = vpop.f32.mrf.mxu0
    %v1002 = vadd.f32 0.0, %v1001
    %v1003 = vpop.f32.mrf.mxu0
    %v1004 = vadd.f32 0.0, %v1003
    %v1005 = vpop.f32.mrf.mxu0
    %v1006 = vadd.f32 0.0, %v1005
    %1007 = vdwg.mxu0
    %v1008 = vadd.f32 %v748, %v917
    %v1009 = vadd.f32 %v749, %v919
    %v1010 = vadd.f32 %v750, %v980
    %v1011 = vadd.f32 %v751, %v982
    %v1012 = vadd.f32 %v752, %v921
    %v1013 = vadd.f32 %v753, %v923
    %v1014 = vadd.f32 %v754, %v984
    %v1015 = vadd.f32 %v755, %v986
    %v1016 = vadd.f32 %v756, %v927
    %v1017 = vadd.f32 %v757, %v929
    %v1018 = vadd.f32 %v758, %v990
    %v1019 = vadd.f32 %v759, %v992
    %v1020 = vadd.f32 %v760, %v931
    %v1021 = vadd.f32 %v761, %v933
    %v1022 = vadd.f32 %v762, %v994
    %v1023 = vadd.f32 %v763, %v996
    %v1024 = vadd.f32 %v764, %v937
    %v1025 = vadd.f32 %v765, %v939
    %v1026 = vadd.f32 %v766, %v1000
    %v1027 = vadd.f32 %v767, %v1002
    %v1028 = vadd.f32 %v768, %v941
    %v1029 = vadd.f32 %v769, %v943
    %v1030 = vadd.f32 %v770, %v1004
    %v1031 = vadd.f32 %v771, %v1006
    %vm1032 = vcmask 1041408
    %vm1033 = vcmask 1045508
    %vm1034 = vmor %vm1032, %vm1033
    %v1035 = vrot.slane %v59, 6
    %v1036 = vrot.slane %v1035, 4
    %v1037 = vrot.slane %v60, 6
    %v1038 = vsel %vm1034, %v1036, %v1037
    %v1039 = vrot.slane %v1037, 4
    %v1040 = vrot.slane %v61, 6
    %v1041 = vsel %vm1034, %v1039, %v1040
    %v1042 = vrot.slane %v1040, 4
    %v1043 = vrot.slane %v62, 6
    %v1044 = vsel %vm1034, %v1042, %v1043
    %v1045 = vrot.slane %v63, 6
    %v1046 = vrot.slane %v1045, 4
    %v1047 = vrot.slane %v64, 6
    %v1048 = vsel %vm1034, %v1046, %v1047
    %v1049 = vrot.slane %v1047, 4
    %v1050 = vrot.slane %v65, 6
    %v1051 = vsel %vm1034, %v1049, %v1050
    %v1052 = vrot.slane %v1050, 4
    %v1053 = vrot.slane %v66, 6
    %v1054 = vsel %vm1034, %v1052, %v1053
    %s1055 = scalar_lea.vmem [#allocation2], 256
    %v1056 = vld [vmem:[%s1055] sm:$0xff]
    %v1057 = vld [vmem:[%s1055 + $0x8] sm:$0xff]
    %v1058 = vld [vmem:[%s1055 + $0x10] sm:$0xff]
    %v1059 = vld [vmem:[%s1055 + $0x18] sm:$0xff]
    %v1060 = vld [vmem:[%s1055 + $0x20] sm:$0xff]
    %v1061 = vld [vmem:[%s1055 + $0x28] sm:$0xff]
    %v1062 = vld [vmem:[%s1055 + $0x30] sm:$0xff]
    %v1063 = vld [vmem:[%s1055 + $0x38] sm:$0xff]
    %v1064 = vunpack.c.l.b16 %v1038
    %v1065 = vunpack.c.l.b16 %v1041
    %v1066 = vunpack.c.l.b16 %v1044
    %v1067 = vunpack.c.l.b16 %v1048
    %v1068 = vunpack.c.l.b16 %v1051
    %v1069 = vunpack.c.l.b16 %v1054
    %v1070 = vpack.c.b16 %v1065, %v1064
    %v1071 = vpack.c.b16 %v1067, %v1066
    %v1072 = vpack.c.b16 %v1069, %v1068
    %v1081 = vunpack.c.l.b16 %v1056
    %v1082 = vunpack.c.h.b16 %v1056
    %v1083 = vunpack.c.l.b16 %v1057
    %v1084 = vunpack.c.h.b16 %v1057
    %v1085 = vunpack.c.l.b16 %v1058
    %v1086 = vunpack.c.h.b16 %v1058
    %v1087 = vunpack.c.l.b16 %v1059
    %v1088 = vunpack.c.h.b16 %v1059
    %v1089 = vunpack.c.l.b16 %v1060
    %v1090 = vunpack.c.h.b16 %v1060
    %v1091 = vunpack.c.l.b16 %v1061
    %v1092 = vunpack.c.h.b16 %v1061
    %v1093 = vunpack.c.l.b16 %v1062
    %v1094 = vunpack.c.h.b16 %v1062
    %v1095 = vunpack.c.l.b16 %v1063
    %v1096 = vunpack.c.h.b16 %v1063
    %v1097 = vpack.c.b16 %v1085, %v1081
    %v1098 = vpack.c.b16 %v1086, %v1082
    %v1099 = vpack.c.b16 %v1087, %v1083
    %v1100 = vpack.c.b16 %v1088, %v1084
    %v1101 = vpack.c.b16 %v1093, %v1089
    %v1102 = vpack.c.b16 %v1094, %v1090
    %v1103 = vpack.c.b16 %v1095, %v1091
    %v1104 = vpack.c.b16 %v1096, %v1092
    %v1114 = vsel %vm204, %v1070, 0
    %v1117 = vsel %vm204, %v1071, 0
    %v1120 = vsel %vm204, %v1072, 0
    %1122 = vmatprep.subr.bf16.mxu0 0
    %1123 = vmatpush1.bf16.msra.mxu0 0
    %1124 = vmatprep.subr.bf16.mxu0 0
    %1125 = vmatpush1.bf16.msra.mxu0 0
    %1126 = vmatprep.subr.bf16.mxu0 0
    %1127 = vmatpush1.bf16.msra.mxu0 0
    %1128 = vmatprep.subr.bf16.mxu0 0
    %1129 = vmatpush1.bf16.msra.mxu0 0
    %1130 = vmatprep.subr.bf16.mxu0 0
    %1131 = vmatpush1.bf16.msra.mxu0 0
    %1132 = vmatprep.subr.bf16.mxu0 0
    %1133 = vmatpush1.bf16.msra.mxu0 0
    %1134 = vmatprep.subr.bf16.mxu0 %v1102
    %1135 = vmatpush1.bf16.msra.mxu0 %v1101
    %1136 = vmatprep.subr.bf16.mxu0 %v1098
    %1137 = vmatpush1.bf16.msra.mxu0 %v1097
    %1138 = vmatprep.subr.bf16.mxu0 0
    %1139 = vmatpush2.bf16.msra.mxu0 0
    %1140 = vmatprep.subr.bf16.mxu0 0
    %1141 = vmatpush2.bf16.msra.mxu0 0
    %1142 = vmatprep.subr.bf16.mxu0 0
    %1143 = vmatpush2.bf16.msra.mxu0 0
    %1144 = vmatprep.subr.bf16.mxu0 0
    %1145 = vmatpush2.bf16.msra.mxu0 0
    %1146 = vmatprep.subr.bf16.mxu0 0
    %1147 = vmatpush2.bf16.msra.mxu0 0
    %1148 = vmatprep.subr.bf16.mxu0 0
    %1149 = vmatpush2.bf16.msra.mxu0 0
    %1150 = vmatprep.subr.bf16.mxu0 0
    %1151 = vmatpush2.bf16.msra.mxu0 0
    %1152 = vmatprep.subr.bf16.mxu0 0
    %1153 = vmatpush2.bf16.msra.mxu0 0
    %1154 = vmatprep.mubr.bf16.mxu0 0
    %1155 = vmatmul.mubr.bf16.gmra.mxu0 %v1114
    %v1156 = vpop.f32.mrf.mxu0
    %v1157 = vadd.f32 0.0, %v1156
    %v1158 = vpop.f32.mrf.mxu0
    %v1159 = vadd.f32 0.0, %v1158
    %v1160 = vpop.f32.mrf.mxu0
    %v1161 = vadd.f32 0.0, %v1160
    %v1162 = vpop.f32.mrf.mxu0
    %v1163 = vadd.f32 0.0, %v1162
    %1164 = vmatprep.mubr.bf16.mxu0 0
    %1165 = vmatmul.mubr.bf16.gmra.mxu0 %v1117
    %v1166 = vpop.f32.mrf.mxu0
    %v1167 = vadd.f32 0.0, %v1166
    %v1168 = vpop.f32.mrf.mxu0
    %v1169 = vadd.f32 0.0, %v1168
    %v1170 = vpop.f32.mrf.mxu0
    %v1171 = vadd.f32 0.0, %v1170
    %v1172 = vpop.f32.mrf.mxu0
    %v1173 = vadd.f32 0.0, %v1172
    %1174 = vmatprep.mubr.bf16.mxu0 0
    %1175 = vmatmul.mubr.bf16.gmra.mxu0 %v1120
    %v1176 = vpop.f32.mrf.mxu0
    %v1177 = vadd.f32 0.0, %v1176
    %v1178 = vpop.f32.mrf.mxu0
    %v1179 = vadd.f32 0.0, %v1178
    %v1180 = vpop.f32.mrf.mxu0
    %v1181 = vadd.f32 0.0, %v1180
    %v1182 = vpop.f32.mrf.mxu0
    %v1183 = vadd.f32 0.0, %v1182
    %1184 = vdwg.mxu0
    %1185 = vmatprep.subr.bf16.mxu0 0
    %1186 = vmatpush1.bf16.msra.mxu0 0
    %1187 = vmatprep.subr.bf16.mxu0 0
    %1188 = vmatpush1.bf16.msra.mxu0 0
    %1189 = vmatprep.subr.bf16.mxu0 0
    %1190 = vmatpush1.bf16.msra.mxu0 0
    %1191 = vmatprep.subr.bf16.mxu0 0
    %1192 = vmatpush1.bf16.msra.mxu0 0
    %1193 = vmatprep.subr.bf16.mxu0 0
    %1194 = vmatpush1.bf16.msra.mxu0 0
    %1195 = vmatprep.subr.bf16.mxu0 0
    %1196 = vmatpush1.bf16.msra.mxu0 0
    %1197 = vmatprep.subr.bf16.mxu0 %v1104
    %1198 = vmatpush1.bf16.msra.mxu0 %v1103
    %1199 = vmatprep.subr.bf16.mxu0 %v1100
    %1200 = vmatpush1.bf16.msra.mxu0 %v1099
    %1201 = vmatprep.subr.bf16.mxu0 0
    %1202 = vmatpush2.bf16.msra.mxu0 0
    %1203 = vmatprep.subr.bf16.mxu0 0
    %1204 = vmatpush2.bf16.msra.mxu0 0
    %1205 = vmatprep.subr.bf16.mxu0 0
    %1206 = vmatpush2.bf16.msra.mxu0 0
    %1207 = vmatprep.subr.bf16.mxu0 0
    %1208 = vmatpush2.bf16.msra.mxu0 0
    %1209 = vmatprep.subr.bf16.mxu0 0
    %1210 = vmatpush2.bf16.msra.mxu0 0
    %1211 = vmatprep.subr.bf16.mxu0 0
    %1212 = vmatpush2.bf16.msra.mxu0 0
    %1213 = vmatprep.subr.bf16.mxu0 0
    %1214 = vmatpush2.bf16.msra.mxu0 0
    %1215 = vmatprep.subr.bf16.mxu0 0
    %1216 = vmatpush2.bf16.msra.mxu0 0
    %1217 = vmatprep.mubr.bf16.mxu0 0
    %1218 = vmatmul.mubr.bf16.gmra.mxu0 %v1114
    %v1219 = vpop.f32.mrf.mxu0
    %v1220 = vadd.f32 0.0, %v1219
    %v1221 = vpop.f32.mrf.mxu0
    %v1222 = vadd.f32 0.0, %v1221
    %v1223 = vpop.f32.mrf.mxu0
    %v1224 = vadd.f32 0.0, %v1223
    %v1225 = vpop.f32.mrf.mxu0
    %v1226 = vadd.f32 0.0, %v1225
    %1227 = vmatprep.mubr.bf16.mxu0 0
    %1228 = vmatmul.mubr.bf16.gmra.mxu0 %v1117
    %v1229 = vpop.f32.mrf.mxu0
    %v1230 = vadd.f32 0.0, %v1229
    %v1231 = vpop.f32.mrf.mxu0
    %v1232 = vadd.f32 0.0, %v1231
    %v1233 = vpop.f32.mrf.mxu0
    %v1234 = vadd.f32 0.0, %v1233
    %v1235 = vpop.f32.mrf.mxu0
    %v1236 = vadd.f32 0.0, %v1235
    %1237 = vmatprep.mubr.bf16.mxu0 0
    %1238 = vmatmul.mubr.bf16.gmra.mxu0 %v1120
    %v1239 = vpop.f32.mrf.mxu0
    %v1240 = vadd.f32 0.0, %v1239
    %v1241 = vpop.f32.mrf.mxu0
    %v1242 = vadd.f32 0.0, %v1241
    %v1243 = vpop.f32.mrf.mxu0
    %v1244 = vadd.f32 0.0, %v1243
    %v1245 = vpop.f32.mrf.mxu0
    %v1246 = vadd.f32 0.0, %v1245
    %1247 = vdwg.mxu0
    %v1248 = vadd.f32 %v1008, %v1157
    %v1249 = vadd.f32 %v1009, %v1159
    %v1250 = vadd.f32 %v1010, %v1220
    %v1251 = vadd.f32 %v1011, %v1222
    %v1252 = vadd.f32 %v1012, %v1161
    %v1253 = vadd.f32 %v1013, %v1163
    %v1254 = vadd.f32 %v1014, %v1224
    %v1255 = vadd.f32 %v1015, %v1226
    %v1256 = vadd.f32 %v1016, %v1167
    %v1257 = vadd.f32 %v1017, %v1169
    %v1258 = vadd.f32 %v1018, %v1230
    %v1259 = vadd.f32 %v1019, %v1232
    %v1260 = vadd.f32 %v1020, %v1171
    %v1261 = vadd.f32 %v1021, %v1173
    %v1262 = vadd.f32 %v1022, %v1234
    %v1263 = vadd.f32 %v1023, %v1236
    %v1264 = vadd.f32 %v1024, %v1177
    %v1265 = vadd.f32 %v1025, %v1179
    %v1266 = vadd.f32 %v1026, %v1240
    %v1267 = vadd.f32 %v1027, %v1242
    %v1268 = vadd.f32 %v1028, %v1181
    %v1269 = vadd.f32 %v1029, %v1183
    %v1270 = vadd.f32 %v1030, %v1244
    %v1271 = vadd.f32 %v1031, %v1246
    %v1272 = vld [vmem:[%s2] sm:$0xf]
    %v1274 = vlaneseq
    %v1275 = vshrl.u32 %v1274, 7
    %v1276 = vsub.s32 0, %v1275
    %v1277 = vrot.slane %v1272, %v1276
    %v1278 = vlaneseq
    %v1279 = vshrl.u32 %v1278, 7
    %v1280 = vsub.s32 1, %v1279
    %v1281 = vrot.slane %v1272, %v1280
    %v1282 = vlaneseq
    %v1283 = vshrl.u32 %v1282, 7
    %v1284 = vsub.s32 2, %v1283
    %v1285 = vrot.slane %v1272, %v1284
    %v1286 = vlaneseq
    %v1287 = vshrl.u32 %v1286, 7
    %v1288 = vsub.s32 3, %v1287
    %v1289 = vrot.slane %v1272, %v1288
    %v1294 = vadd.f32 %v1248, %v1277
    %v1295 = vadd.f32 %v1249, %v1281
    %v1296 = vadd.f32 %v1250, %v1285
    %v1297 = vadd.f32 %v1251, %v1289
    %v1298 = vadd.f32 %v1252, %v1277
    %v1299 = vadd.f32 %v1253, %v1281
    %v1300 = vadd.f32 %v1254, %v1285
    %v1301 = vadd.f32 %v1255, %v1289
    %v1302 = vadd.f32 %v1256, %v1277
    %v1303 = vadd.f32 %v1257, %v1281
    %v1304 = vadd.f32 %v1258, %v1285
    %v1305 = vadd.f32 %v1259, %v1289
    %v1306 = vadd.f32 %v1260, %v1277
    %v1307 = vadd.f32 %v1261, %v1281
    %v1308 = vadd.f32 %v1262, %v1285
    %v1309 = vadd.f32 %v1263, %v1289
    %v1310 = vadd.f32 %v1264, %v1277
    %v1311 = vadd.f32 %v1265, %v1281
    %v1312 = vadd.f32 %v1266, %v1285
    %v1313 = vadd.f32 %v1267, %v1289
    %v1314 = vadd.f32 %v1268, %v1277
    %v1315 = vadd.f32 %v1269, %v1281
    %v1316 = vadd.f32 %v1270, %v1285
    %v1317 = vadd.f32 %v1271, %v1289
    %vm1318 = vcmp.gt.f32.partialorder %v1294, 0.0
    %vm1319 = vcmp.gt.f32.partialorder %v1295, 0.0
    %vm1320 = vcmp.gt.f32.partialorder %v1296, 0.0
    %vm1321 = vcmp.gt.f32.partialorder %v1297, 0.0
    %vm1322 = vcmp.gt.f32.partialorder %v1298, 0.0
    %vm1323 = vcmp.gt.f32.partialorder %v1299, 0.0
    %vm1324 = vcmp.gt.f32.partialorder %v1300, 0.0
    %vm1325 = vcmp.gt.f32.partialorder %v1301, 0.0
    %vm1326 = vcmp.gt.f32.partialorder %v1302, 0.0
    %vm1327 = vcmp.gt.f32.partialorder %v1303, 0.0
    %vm1328 = vcmp.gt.f32.partialorder %v1304, 0.0
    %vm1329 = vcmp.gt.f32.partialorder %v1305, 0.0
    %vm1330 = vcmp.gt.f32.partialorder %v1306, 0.0
    %vm1331 = vcmp.gt.f32.partialorder %v1307, 0.0
    %vm1332 = vcmp.gt.f32.partialorder %v1308, 0.0
    %vm1333 = vcmp.gt.f32.partialorder %v1309, 0.0
    %vm1334 = vcmp.gt.f32.partialorder %v1310, 0.0
    %vm1335 = vcmp.gt.f32.partialorder %v1311, 0.0
    %vm1336 = vcmp.gt.f32.partialorder %v1312, 0.0
    %vm1337 = vcmp.gt.f32.partialorder %v1313, 0.0
    %vm1338 = vcmp.gt.f32.partialorder %v1314, 0.0
    %vm1339 = vcmp.gt.f32.partialorder %v1315, 0.0
    %vm1340 = vcmp.gt.f32.partialorder %v1316, 0.0
    %vm1341 = vcmp.gt.f32.partialorder %v1317, 0.0
    %v1342 = vmul.f32 %v1294, 0.1
    %v1343 = vmul.f32 %v1295, 0.1
    %v1344 = vmul.f32 %v1296, 0.1
    %v1345 = vmul.f32 %v1297, 0.1
    %v1346 = vmul.f32 %v1298, 0.1
    %v1347 = vmul.f32 %v1299, 0.1
    %v1348 = vmul.f32 %v1300, 0.1
    %v1349 = vmul.f32 %v1301, 0.1
    %v1350 = vmul.f32 %v1302, 0.1
    %v1351 = vmul.f32 %v1303, 0.1
    %v1352 = vmul.f32 %v1304, 0.1
    %v1353 = vmul.f32 %v1305, 0.1
    %v1354 = vmul.f32 %v1306, 0.1
    %v1355 = vmul.f32 %v1307, 0.1
    %v1356 = vmul.f32 %v1308, 0.1
    %v1357 = vmul.f32 %v1309, 0.1
    %v1358 = vmul.f32 %v1310, 0.1
    %v1359 = vmul.f32 %v1311, 0.1
    %v1360 = vmul.f32 %v1312, 0.1
    %v1361 = vmul.f32 %v1313, 0.1
    %v1362 = vmul.f32 %v1314, 0.1
    %v1363 = vmul.f32 %v1315, 0.1
    %v1364 = vmul.f32 %v1316, 0.1
    %v1365 = vmul.f32 %v1317, 0.1
    %v1366 = vsel %vm1318, %v1294, %v1342
    %v1367 = vsel %vm1319, %v1295, %v1343
    %v1368 = vsel %vm1320, %v1296, %v1344
    %v1369 = vsel %vm1321, %v1297, %v1345
    %v1370 = vsel %vm1322, %v1298, %v1346
    %v1371 = vsel %vm1323, %v1299, %v1347
    %v1372 = vsel %vm1324, %v1300, %v1348
    %v1373 = vsel %vm1325, %v1301, %v1349
    %v1374 = vsel %vm1326, %v1302, %v1350
    %v1375 = vsel %vm1327, %v1303, %v1351
    %v1376 = vsel %vm1328, %v1304, %v1352
    %v1377 = vsel %vm1329, %v1305, %v1353
    %v1378 = vsel %vm1330, %v1306, %v1354
    %v1379 = vsel %vm1331, %v1307, %v1355
    %v1380 = vsel %vm1332, %v1308, %v1356
    %v1381 = vsel %vm1333, %v1309, %v1357
    %v1382 = vsel %vm1334, %v1310, %v1358
    %v1383 = vsel %vm1335, %v1311, %v1359
    %v1384 = vsel %vm1336, %v1312, %v1360
    %v1385 = vsel %vm1337, %v1313, %v1361
    %v1386 = vsel %vm1338, %v1314, %v1362
    %v1387 = vsel %vm1339, %v1315, %v1363
    %v1388 = vsel %vm1340, %v1316, %v1364
    %v1389 = vsel %vm1341, %v1317, %v1365
    %v1390 = vlaneseq
    %v1391 = vshrl.u32 %v1390, 7
    %v1392 = vadd.s32 %v1391, 8
    %v1393 = vadd.s32 %v1391, 16
    %v1394 = vld [vmem:[%s3] sm:$0xf]
    %v1395 = vlaneseq
    %v1396 = vshrl.u32 %v1395, 7
    %v1397 = vsub.s32 0, %v1396
    %v1398 = vrot.slane %v1394, %v1397
    %v1399 = vlaneseq
    %v1400 = vshrl.u32 %v1399, 7
    %v1401 = vsub.s32 1, %v1400
    %v1402 = vrot.slane %v1394, %v1401
    %v1403 = vlaneseq
    %v1404 = vshrl.u32 %v1403, 7
    %v1405 = vsub.s32 2, %v1404
    %v1406 = vrot.slane %v1394, %v1405
    %v1407 = vlaneseq
    %v1408 = vshrl.u32 %v1407, 7
    %v1409 = vsub.s32 3, %v1408
    %v1410 = vrot.slane %v1394, %v1409
    %vm1411 = vcmp.lt.s32.totalorder %v1391, %v1398
    %vm1412 = vcmp.lt.s32.totalorder %v1391, %v1402
    %vm1413 = vcmp.lt.s32.totalorder %v1391, %v1406
    %vm1414 = vcmp.lt.s32.totalorder %v1391, %v1410
    %vm1415 = vcmp.lt.s32.totalorder %v1392, %v1398
    %vm1416 = vcmp.lt.s32.totalorder %v1392, %v1402
    %vm1417 = vcmp.lt.s32.totalorder %v1392, %v1406
    %vm1418 = vcmp.lt.s32.totalorder %v1392, %v1410
    %vm1419 = vcmp.lt.s32.totalorder %v1393, %v1398
    %vm1420 = vcmp.lt.s32.totalorder %v1393, %v1402
    %vm1421 = vcmp.lt.s32.totalorder %v1393, %v1406
    %vm1422 = vcmp.lt.s32.totalorder %v1393, %v1410
    %v1423 = vsel %vm1411, %v1366, -inf
    %v1424 = vsel %vm1412, %v1367, -inf
    %v1425 = vsel %vm1413, %v1368, -inf
    %v1426 = vsel %vm1414, %v1369, -inf
    %v1427 = vsel %vm1415, %v1370, -inf
    %v1428 = vsel %vm1416, %v1371, -inf
    %v1429 = vsel %vm1417, %v1372, -inf
    %v1430 = vsel %vm1418, %v1373, -inf
    %v1431 = vsel %vm1419, %v1374, -inf
    %v1432 = vsel %vm1420, %v1375, -inf
    %v1433 = vsel %vm1421, %v1376, -inf
    %v1434 = vsel %vm1422, %v1377, -inf
    %v1435 = vsel %vm1411, %v1378, -inf
    %v1436 = vsel %vm1412, %v1379, -inf
    %v1437 = vsel %vm1413, %v1380, -inf
    %v1438 = vsel %vm1414, %v1381, -inf
    %v1439 = vsel %vm1415, %v1382, -inf
    %v1440 = vsel %vm1416, %v1383, -inf
    %v1441 = vsel %vm1417, %v1384, -inf
    %v1442 = vsel %vm1418, %v1385, -inf
    %v1443 = vsel %vm1419, %v1386, -inf
    %v1444 = vsel %vm1420, %v1387, -inf
    %v1445 = vsel %vm1421, %v1388, -inf
    %v1446 = vsel %vm1422, %v1389, -inf
    %v1447 = vmax.f32 %v1423, %v1427
    %v1448 = vmax.f32 %v1447, %v1431
    %v1449 = vrot.slane %v1448, 4
    %v1450 = vmax.f32 %v1448, %v1449
    %v1451 = vrot.slane %v1450, 2
    %v1452 = vmax.f32 %v1450, %v1451
    %v1453 = vrot.slane %v1452, 1
    %v1454 = vmax.f32 %v1452, %v1453
    %v1455 = vmax.f32 %v1424, %v1428
    %v1456 = vmax.f32 %v1455, %v1432
    %v1457 = vrot.slane %v1456, 4
    %v1458 = vmax.f32 %v1456, %v1457
    %v1459 = vrot.slane %v1458, 2
    %v1460 = vmax.f32 %v1458, %v1459
    %v1461 = vrot.slane %v1460, 1
    %v1462 = vmax.f32 %v1460, %v1461
    %v1463 = vmax.f32 %v1425, %v1429
    %v1464 = vmax.f32 %v1463, %v1433
    %v1465 = vrot.slane %v1464, 4
    %v1466 = vmax.f32 %v1464, %v1465
    %v1467 = vrot.slane %v1466, 2
    %v1468 = vmax.f32 %v1466, %v1467
    %v1469 = vrot.slane %v1468, 1
    %v1470 = vmax.f32 %v1468, %v1469
    %v1471 = vmax.f32 %v1426, %v1430
    %v1472 = vmax.f32 %v1471, %v1434
    %v1473 = vrot.slane %v1472, 4
    %v1474 = vmax.f32 %v1472, %v1473
    %v1475 = vrot.slane %v1474, 2
    %v1476 = vmax.f32 %v1474, %v1475
    %v1477 = vrot.slane %v1476, 1
    %v1478 = vmax.f32 %v1476, %v1477
    %v1479 = vmax.f32 %v1435, %v1439
    %v1480 = vmax.f32 %v1479, %v1443
    %v1481 = vrot.slane %v1480, 4
    %v1482 = vmax.f32 %v1480, %v1481
    %v1483 = vrot.slane %v1482, 2
    %v1484 = vmax.f32 %v1482, %v1483
    %v1485 = vrot.slane %v1484, 1
    %v1486 = vmax.f32 %v1484, %v1485
    %v1487 = vmax.f32 %v1436, %v1440
    %v1488 = vmax.f32 %v1487, %v1444
    %v1489 = vrot.slane %v1488, 4
    %v1490 = vmax.f32 %v1488, %v1489
    %v1491 = vrot.slane %v1490, 2
    %v1492 = vmax.f32 %v1490, %v1491
    %v1493 = vrot.slane %v1492, 1
    %v1494 = vmax.f32 %v1492, %v1493
    %v1495 = vmax.f32 %v1437, %v1441
    %v1496 = vmax.f32 %v1495, %v1445
    %v1497 = vrot.slane %v1496, 4
    %v1498 = vmax.f32 %v1496, %v1497
    %v1499 = vrot.slane %v1498, 2
    %v1500 = vmax.f32 %v1498, %v1499
    %v1501 = vrot.slane %v1500, 1
    %v1502 = vmax.f32 %v1500, %v1501
    %v1503 = vmax.f32 %v1438, %v1442
    %v1504 = vmax.f32 %v1503, %v1446
    %v1505 = vrot.slane %v1504, 4
    %v1506 = vmax.f32 %v1504, %v1505
    %v1507 = vrot.slane %v1506, 2
    %v1508 = vmax.f32 %v1506, %v1507
    %v1509 = vrot.slane %v1508, 1
    %v1510 = vmax.f32 %v1508, %v1509
    %v1511 = vpack.c.bf16 %v1454, %v1454
    %v1512 = vpack.c.bf16 %v1462, %v1462
    %v1513 = vpack.c.bf16 %v1470, %v1470
    %v1514 = vpack.c.bf16 %v1478, %v1478
    %v1515 = vpack.c.bf16 %v1486, %v1486
    %v1516 = vpack.c.bf16 %v1494, %v1494
    %v1517 = vpack.c.bf16 %v1502, %v1502
    %v1518 = vpack.c.bf16 %v1510, %v1510
    %v1519 = vld [vmem:[#allocation5] sm:$0xff]
    %v1520 = vld [vmem:[#allocation5 + $0x8] sm:$0xff]
    %v1521 = vld [vmem:[#allocation5 + $0x10] sm:$0xff]
    %v1522 = vld [vmem:[#allocation5 + $0x18] sm:$0xff]
    %v1523 = vld [vmem:[#allocation5 + $0x20] sm:$0xff]
    %v1524 = vld [vmem:[#allocation5 + $0x28] sm:$0xff]
    %v1525 = vld [vmem:[#allocation5 + $0x30] sm:$0xff]
    %v1526 = vld [vmem:[#allocation5 + $0x38] sm:$0xff]
    %v1527 = vld [vmem:[#allocation5 + $0x40] sm:$0xff]
    %v1528 = vld [vmem:[#allocation5 + $0x48] sm:$0xff]
    %v1529 = vld [vmem:[#allocation5 + $0x50] sm:$0xff]
    %v1530 = vld [vmem:[#allocation5 + $0x58] sm:$0xff]
    %v1531 = vld [vmem:[#allocation5 + $0x60] sm:$0xff]
    %v1532 = vld [vmem:[#allocation5 + $0x68] sm:$0xff]
    %v1533 = vld [vmem:[#allocation5 + $0x70] sm:$0xff]
    %v1534 = vld [vmem:[#allocation5 + $0x78] sm:$0xff]
    %v1535 = vld [vmem:[#allocation5 + $0x80] sm:$0xff]
    %v1536 = vld [vmem:[#allocation5 + $0x88] sm:$0xff]
    %v1537 = vld [vmem:[#allocation5 + $0x90] sm:$0xff]
    %v1538 = vld [vmem:[#allocation5 + $0x98] sm:$0xff]
    %v1539 = vld [vmem:[#allocation5 + $0xa0] sm:$0xff]
    %v1540 = vld [vmem:[#allocation5 + $0xa8] sm:$0xff]
    %v1541 = vld [vmem:[#allocation5 + $0xb0] sm:$0xff]
    %v1542 = vld [vmem:[#allocation5 + $0xb8] sm:$0xff]
    %v1543 = vld [vmem:[#allocation5 + $0xc0] sm:$0xff]
    %v1544 = vld [vmem:[#allocation5 + $0xc8] sm:$0xff]
    %v1545 = vld [vmem:[#allocation5 + $0xd0] sm:$0xff]
    %v1546 = vld [vmem:[#allocation5 + $0xd8] sm:$0xff]
    %v1547 = vld [vmem:[#allocation5 + $0xe0] sm:$0xff]
    %v1548 = vld [vmem:[#allocation5 + $0xe8] sm:$0xff]
    %v1549 = vld [vmem:[#allocation5 + $0xf0] sm:$0xff]
    %v1550 = vld [vmem:[#allocation5 + $0xf8] sm:$0xff]
    %v1551 = vld [vmem:[#allocation5 + $0x100] sm:$0xff]
    %v1552 = vld [vmem:[#allocation5 + $0x108] sm:$0xff]
    %v1553 = vld [vmem:[#allocation5 + $0x110] sm:$0xff]
    %v1554 = vld [vmem:[#allocation5 + $0x118] sm:$0xff]
    %v1555 = vld [vmem:[#allocation5 + $0x120] sm:$0xff]
    %v1556 = vld [vmem:[#allocation5 + $0x128] sm:$0xff]
    %v1557 = vld [vmem:[#allocation5 + $0x130] sm:$0xff]
    %v1558 = vld [vmem:[#allocation5 + $0x138] sm:$0xff]
    %v1559 = vld [vmem:[#allocation5 + $0x140] sm:$0xff]
    %v1560 = vld [vmem:[#allocation5 + $0x148] sm:$0xff]
    %v1561 = vld [vmem:[#allocation5 + $0x150] sm:$0xff]
    %v1562 = vld [vmem:[#allocation5 + $0x158] sm:$0xff]
    %v1563 = vld [vmem:[#allocation5 + $0x160] sm:$0xff]
    %v1564 = vld [vmem:[#allocation5 + $0x168] sm:$0xff]
    %v1565 = vld [vmem:[#allocation5 + $0x170] sm:$0xff]
    %v1566 = vld [vmem:[#allocation5 + $0x178] sm:$0xff]
    %v1567 = vld [vmem:[#allocation5 + $0x180] sm:$0xff]
    %v1568 = vld [vmem:[#allocation5 + $0x188] sm:$0xff]
    %v1569 = vld [vmem:[#allocation5 + $0x190] sm:$0xff]
    %v1570 = vld [vmem:[#allocation5 + $0x198] sm:$0xff]
    %v1571 = vld [vmem:[#allocation5 + $0x1a0] sm:$0xff]
    %v1572 = vld [vmem:[#allocation5 + $0x1a8] sm:$0xff]
    %v1573 = vld [vmem:[#allocation5 + $0x1b0] sm:$0xff]
    %v1574 = vld [vmem:[#allocation5 + $0x1b8] sm:$0xff]
    %v1575 = vld [vmem:[#allocation5 + $0x1c0] sm:$0xff]
    %v1576 = vld [vmem:[#allocation5 + $0x1c8] sm:$0xff]
    %v1577 = vld [vmem:[#allocation5 + $0x1d0] sm:$0xff]
    %v1578 = vld [vmem:[#allocation5 + $0x1d8] sm:$0xff]
    %v1579 = vld [vmem:[#allocation5 + $0x1e0] sm:$0xff]
    %v1580 = vld [vmem:[#allocation5 + $0x1e8] sm:$0xff]
    %v1581 = vld [vmem:[#allocation5 + $0x1f0] sm:$0xff]
    %v1582 = vld [vmem:[#allocation5 + $0x1f8] sm:$0xff]
    %v1583 = vld [vmem:[%s5] sm:$0x3]
    %v1585 = vlaneseq
    %v1586 = vshrl.u32 %v1585, 7
    %v1587 = vsub.s32 0, %v1586
    %v1588 = vrot.slane %v1583, %v1587
    %v1589 = vlaneseq
    %v1590 = vshrl.u32 %v1589, 7
    %v1591 = vsub.s32 1, %v1590
    %v1592 = vrot.slane %v1583, %v1591
    %v1603 = vunpack.c.l.b16 %v1511
    %v1604 = vunpack.c.l.b16 %v1512
    %v1605 = vunpack.c.l.b16 %v1513
    %v1606 = vunpack.c.l.b16 %v1514
    %v1607 = vunpack.c.l.b16 %v1515
    %v1608 = vunpack.c.l.b16 %v1516
    %v1609 = vunpack.c.l.b16 %v1517
    %v1610 = vunpack.c.l.b16 %v1518
    %vm1611 = vcmask 1041409
    %v1612 = vsel %vm1611, %v1607, %v1603
    %v1613 = vsel %vm1611, %v1608, %v1604
    %v1614 = vsel %vm1611, %v1609, %v1605
    %v1615 = vsel %vm1611, %v1610, %v1606
    %v1616 = vpack.c.b16 %v1612, %v1612
    %v1617 = vpack.c.b16 %v1613, %v1613
    %v1618 = vpack.c.b16 %v1614, %v1614
    %v1619 = vpack.c.b16 %v1615, %v1615
    %v1688 = vunpack.c.l.b16 %v1519
    %v1689 = vunpack.c.h.b16 %v1519
    %v1690 = vunpack.c.l.b16 %v1520
    %v1691 = vunpack.c.h.b16 %v1520
    %v1692 = vunpack.c.l.b16 %v1521
    %v1693 = vunpack.c.h.b16 %v1521
    %v1694 = vunpack.c.l.b16 %v1522
    %v1695 = vunpack.c.h.b16 %v1522
    %v1696 = vunpack.c.l.b16 %v1523
    %v1697 = vunpack.c.h.b16 %v1523
    %v1698 = vunpack.c.l.b16 %v1524
    %v1699 = vunpack.c.h.b16 %v1524
    %v1700 = vunpack.c.l.b16 %v1525
    %v1701 = vunpack.c.h.b16 %v1525
    %v1702 = vunpack.c.l.b16 %v1526
    %v1703 = vunpack.c.h.b16 %v1526
    %v1704 = vunpack.c.l.b16 %v1527
    %v1705 = vunpack.c.h.b16 %v1527
    %v1706 = vunpack.c.l.b16 %v1528
    %v1707 = vunpack.c.h.b16 %v1528
    %v1708 = vunpack.c.l.b16 %v1529
    %v1709 = vunpack.c.h.b16 %v1529
    %v1710 = vunpack.c.l.b16 %v1530
    %v1711 = vunpack.c.h.b16 %v1530
    %v1712 = vunpack.c.l.b16 %v1531
    %v1713 = vunpack.c.h.b16 %v1531
    %v1714 = vunpack.c.l.b16 %v1532
    %v1715 = vunpack.c.h.b16 %v1532
    %v1716 = vunpack.c.l.b16 %v1533
    %v1717 = vunpack.c.h.b16 %v1533
    %v1718 = vunpack.c.l.b16 %v1534
    %v1719 = vunpack.c.h.b16 %v1534
    %v1720 = vunpack.c.l.b16 %v1535
    %v1721 = vunpack.c.h.b16 %v1535
    %v1722 = vunpack.c.l.b16 %v1536
    %v1723 = vunpack.c.h.b16 %v1536
    %v1724 = vunpack.c.l.b16 %v1537
    %v1725 = vunpack.c.h.b16 %v1537
    %v1726 = vunpack.c.l.b16 %v1538
    %v1727 = vunpack.c.h.b16 %v1538
    %v1728 = vunpack.c.l.b16 %v1539
    %v1729 = vunpack.c.h.b16 %v1539
    %v1730 = vunpack.c.l.b16 %v1540
    %v1731 = vunpack.c.h.b16 %v1540
    %v1732 = vunpack.c.l.b16 %v1541
    %v1733 = vunpack.c.h.b16 %v1541
    %v1734 = vunpack.c.l.b16 %v1542
    %v1735 = vunpack.c.h.b16 %v1542
    %v1736 = vunpack.c.l.b16 %v1543
    %v1737 = vunpack.c.h.b16 %v1543
    %v1738 = vunpack.c.l.b16 %v1544
    %v1739 = vunpack.c.h.b16 %v1544
    %v1740 = vunpack.c.l.b16 %v1545
    %v1741 = vunpack.c.h.b16 %v1545
    %v1742 = vunpack.c.l.b16 %v1546
    %v1743 = vunpack.c.h.b16 %v1546
    %v1744 = vunpack.c.l.b16 %v1547
    %v1745 = vunpack.c.h.b16 %v1547
    %v1746 = vunpack.c.l.b16 %v1548
    %v1747 = vunpack.c.h.b16 %v1548
    %v1748 = vunpack.c.l.b16 %v1549
    %v1749 = vunpack.c.h.b16 %v1549
    %v1750 = vunpack.c.l.b16 %v1550
    %v1751 = vunpack.c.h.b16 %v1550
    %v1752 = vunpack.c.l.b16 %v1551
    %v1753 = vunpack.c.h.b16 %v1551
    %v1754 = vunpack.c.l.b16 %v1552
    %v1755 = vunpack.c.h.b16 %v1552
    %v1756 = vunpack.c.l.b16 %v1553
    %v1757 = vunpack.c.h.b16 %v1553
    %v1758 = vunpack.c.l.b16 %v1554
    %v1759 = vunpack.c.h.b16 %v1554
    %v1760 = vunpack.c.l.b16 %v1555
    %v1761 = vunpack.c.h.b16 %v1555
    %v1762 = vunpack.c.l.b16 %v1556
    %v1763 = vunpack.c.h.b16 %v1556
    %v1764 = vunpack.c.l.b16 %v1557
    %v1765 = vunpack.c.h.b16 %v1557
    %v1766 = vunpack.c.l.b16 %v1558
    %v1767 = vunpack.c.h.b16 %v1558
    %v1768 = vunpack.c.l.b16 %v1559
    %v1769 = vunpack.c.h.b16 %v1559
    %v1770 = vunpack.c.l.b16 %v1560
    %v1771 = vunpack.c.h.b16 %v1560
    %v1772 = vunpack.c.l.b16 %v1561
    %v1773 = vunpack.c.h.b16 %v1561
    %v1774 = vunpack.c.l.b16 %v1562
    %v1775 = vunpack.c.h.b16 %v1562
    %v1776 = vunpack.c.l.b16 %v1563
    %v1777 = vunpack.c.h.b16 %v1563
    %v1778 = vunpack.c.l.b16 %v1564
    %v1779 = vunpack.c.h.b16 %v1564
    %v1780 = vunpack.c.l.b16 %v1565
    %v1781 = vunpack.c.h.b16 %v1565
    %v1782 = vunpack.c.l.b16 %v1566
    %v1783 = vunpack.c.h.b16 %v1566
    %v1784 = vunpack.c.l.b16 %v1567
    %v1785 = vunpack.c.h.b16 %v1567
    %v1786 = vunpack.c.l.b16 %v1568
    %v1787 = vunpack.c.h.b16 %v1568
    %v1788 = vunpack.c.l.b16 %v1569
    %v1789 = vunpack.c.h.b16 %v1569
    %v1790 = vunpack.c.l.b16 %v1570
    %v1791 = vunpack.c.h.b16 %v1570
    %v1792 = vunpack.c.l.b16 %v1571
    %v1793 = vunpack.c.h.b16 %v1571
    %v1794 = vunpack.c.l.b16 %v1572
    %v1795 = vunpack.c.h.b16 %v1572
    %v1796 = vunpack.c.l.b16 %v1573
    %v1797 = vunpack.c.h.b16 %v1573
    %v1798 = vunpack.c.l.b16 %v1574
    %v1799 = vunpack.c.h.b16 %v1574
    %v1800 = vunpack.c.l.b16 %v1575
    %v1801 = vunpack.c.h.b16 %v1575
    %v1802 = vunpack.c.l.b16 %v1576
    %v1803 = vunpack.c.h.b16 %v1576
    %v1804 = vunpack.c.l.b16 %v1577
    %v1805 = vunpack.c.h.b16 %v1577
    %v1806 = vunpack.c.l.b16 %v1578
    %v1807 = vunpack.c.h.b16 %v1578
    %v1808 = vunpack.c.l.b16 %v1579
    %v1809 = vunpack.c.h.b16 %v1579
    %v1810 = vunpack.c.l.b16 %v1580
    %v1811 = vunpack.c.h.b16 %v1580
    %v1812 = vunpack.c.l.b16 %v1581
    %v1813 = vunpack.c.h.b16 %v1581
    %v1814 = vunpack.c.l.b16 %v1582
    %v1815 = vunpack.c.h.b16 %v1582
    %v1816 = vpack.c.b16 %v1690, %v1688
    %v1817 = vpack.c.b16 %v1691, %v1689
    %v1818 = vpack.c.b16 %v1694, %v1692
    %v1819 = vpack.c.b16 %v1695, %v1693
    %v1820 = vpack.c.b16 %v1698, %v1696
    %v1821 = vpack.c.b16 %v1699, %v1697
    %v1822 = vpack.c.b16 %v1702, %v1700
    %v1823 = vpack.c.b16 %v1703, %v1701
    %v1824 = vpack.c.b16 %v1706, %v1704
    %v1825 = vpack.c.b16 %v1707, %v1705
    %v1826 = vpack.c.b16 %v1710, %v1708
    %v1827 = vpack.c.b16 %v1711, %v1709
    %v1828 = vpack.c.b16 %v1714, %v1712
    %v1829 = vpack.c.b16 %v1715, %v1713
    %v1830 = vpack.c.b16 %v1718, %v1716
    %v1831 = vpack.c.b16 %v1719, %v1717
    %v1832 = vpack.c.b16 %v1722, %v1720
    %v1833 = vpack.c.b16 %v1723, %v1721
    %v1834 = vpack.c.b16 %v1726, %v1724
    %v1835 = vpack.c.b16 %v1727, %v1725
    %v1836 = vpack.c.b16 %v1730, %v1728
    %v1837 = vpack.c.b16 %v1731, %v1729
    %v1838 = vpack.c.b16 %v1734, %v1732
    %v1839 = vpack.c.b16 %v1735, %v1733
    %v1840 = vpack.c.b16 %v1738, %v1736
    %v1841 = vpack.c.b16 %v1739, %v1737
    %v1842 = vpack.c.b16 %v1742, %v1740
    %v1843 = vpack.c.b16 %v1743, %v1741
    %v1844 = vpack.c.b16 %v1746, %v1744
    %v1845 = vpack.c.b16 %v1747, %v1745
    %v1846 = vpack.c.b16 %v1750, %v1748
    %v1847 = vpack.c.b16 %v1751, %v1749
    %v1848 = vpack.c.b16 %v1754, %v1752
    %v1849 = vpack.c.b16 %v1755, %v1753
    %v1850 = vpack.c.b16 %v1758, %v1756
    %v1851 = vpack.c.b16 %v1759, %v1757
    %v1852 = vpack.c.b16 %v1762, %v1760
    %v1853 = vpack.c.b16 %v1763, %v1761
    %v1854 = vpack.c.b16 %v1766, %v1764
    %v1855 = vpack.c.b16 %v1767, %v1765
    %v1856 = vpack.c.b16 %v1770, %v1768
    %v1857 = vpack.c.b16 %v1771, %v1769
    %v1858 = vpack.c.b16 %v1774, %v1772
    %v1859 = vpack.c.b16 %v1775, %v1773
    %v1860 = vpack.c.b16 %v1778, %v1776
    %v1861 = vpack.c.b16 %v1779, %v1777
    %v1862 = vpack.c.b16 %v1782, %v1780
    %v1863 = vpack.c.b16 %v1783, %v1781
    %v1864 = vpack.c.b16 %v1786, %v1784
    %v1865 = vpack.c.b16 %v1787, %v1785
    %v1866 = vpack.c.b16 %v1790, %v1788
    %v1867 = vpack.c.b16 %v1791, %v1789
    %v1868 = vpack.c.b16 %v1794, %v1792
    %v1869 = vpack.c.b16 %v1795, %v1793
    %v1870 = vpack.c.b16 %v1798, %v1796
    %v1871 = vpack.c.b16 %v1799, %v1797
    %v1872 = vpack.c.b16 %v1802, %v1800
    %v1873 = vpack.c.b16 %v1803, %v1801
    %v1874 = vpack.c.b16 %v1806, %v1804
    %v1875 = vpack.c.b16 %v1807, %v1805
    %v1876 = vpack.c.b16 %v1810, %v1808
    %v1877 = vpack.c.b16 %v1811, %v1809
    %v1878 = vpack.c.b16 %v1814, %v1812
    %v1879 = vpack.c.b16 %v1815, %v1813
    %1944 = vmatprep.subr.bf16.mxu0 %v1831
    %1945 = vmatpush1.bf16.msra.mxu0 %v1830
    %1946 = vmatprep.subr.bf16.mxu0 %v1829
    %1947 = vmatpush1.bf16.msra.mxu0 %v1828
    %1948 = vmatprep.subr.bf16.mxu0 %v1827
    %1949 = vmatpush1.bf16.msra.mxu0 %v1826
    %1950 = vmatprep.subr.bf16.mxu0 %v1825
    %1951 = vmatpush1.bf16.msra.mxu0 %v1824
    %1952 = vmatprep.subr.bf16.mxu0 %v1823
    %1953 = vmatpush1.bf16.msra.mxu0 %v1822
    %1954 = vmatprep.subr.bf16.mxu0 %v1821
    %1955 = vmatpush1.bf16.msra.mxu0 %v1820
    %1956 = vmatprep.subr.bf16.mxu0 %v1819
    %1957 = vmatpush1.bf16.msra.mxu0 %v1818
    %1958 = vmatprep.subr.bf16.mxu0 %v1817
    %1959 = vmatpush1.bf16.msra.mxu0 %v1816
    %1960 = vmatprep.subr.bf16.mxu0 %v1847
    %1961 = vmatpush2.bf16.msra.mxu0 %v1846
    %1962 = vmatprep.subr.bf16.mxu0 %v1845
    %1963 = vmatpush2.bf16.msra.mxu0 %v1844
    %1964 = vmatprep.subr.bf16.mxu0 %v1843
    %1965 = vmatpush2.bf16.msra.mxu0 %v1842
    %1966 = vmatprep.subr.bf16.mxu0 %v1841
    %1967 = vmatpush2.bf16.msra.mxu0 %v1840
    %1968 = vmatprep.subr.bf16.mxu0 %v1839
    %1969 = vmatpush2.bf16.msra.mxu0 %v1838
    %1970 = vmatprep.subr.bf16.mxu0 %v1837
    %1971 = vmatpush2.bf16.msra.mxu0 %v1836
    %1972 = vmatprep.subr.bf16.mxu0 %v1835
    %1973 = vmatpush2.bf16.msra.mxu0 %v1834
    %1974 = vmatprep.subr.bf16.mxu0 %v1833
    %1975 = vmatpush2.bf16.msra.mxu0 %v1832
    %1976 = vmatprep.mubr.bf16.mxu0 %v1617
    %1977 = vmatmul.mubr.bf16.gmra.mxu0 %v1616
    %v1978 = vpop.f32.mrf.mxu0
    %v1979 = vadd.f32 %v1588, %v1978
    %v1980 = vpop.f32.mrf.mxu0
    %v1981 = vadd.f32 %v1592, %v1980
    %v1982 = vpop.f32.mrf.mxu0
    %v1983 = vpop.f32.mrf.mxu0
    %1984 = vdwg.mxu0
    %1985 = vmatprep.subr.bf16.mxu0 %v1863
    %1986 = vmatpush1.bf16.msra.mxu0 %v1862
    %1987 = vmatprep.subr.bf16.mxu0 %v1861
    %1988 = vmatpush1.bf16.msra.mxu0 %v1860
    %1989 = vmatprep.subr.bf16.mxu0 %v1859
    %1990 = vmatpush1.bf16.msra.mxu0 %v1858
    %1991 = vmatprep.subr.bf16.mxu0 %v1857
    %1992 = vmatpush1.bf16.msra.mxu0 %v1856
    %1993 = vmatprep.subr.bf16.mxu0 %v1855
    %1994 = vmatpush1.bf16.msra.mxu0 %v1854
    %1995 = vmatprep.subr.bf16.mxu0 %v1853
    %1996 = vmatpush1.bf16.msra.mxu0 %v1852
    %1997 = vmatprep.subr.bf16.mxu0 %v1851
    %1998 = vmatpush1.bf16.msra.mxu0 %v1850
    %1999 = vmatprep.subr.bf16.mxu0 %v1849
    %2000 = vmatpush1.bf16.msra.mxu0 %v1848
    %2001 = vmatprep.subr.bf16.mxu0 %v1879
    %2002 = vmatpush2.bf16.msra.mxu0 %v1878
    %2003 = vmatprep.subr.bf16.mxu0 %v1877
    %2004 = vmatpush2.bf16.msra.mxu0 %v1876
    %2005 = vmatprep.subr.bf16.mxu0 %v1875
    %2006 = vmatpush2.bf16.msra.mxu0 %v1874
    %2007 = vmatprep.subr.bf16.mxu0 %v1873
    %2008 = vmatpush2.bf16.msra.mxu0 %v1872
    %2009 = vmatprep.subr.bf16.mxu0 %v1871
    %2010 = vmatpush2.bf16.msra.mxu0 %v1870
    %2011 = vmatprep.subr.bf16.mxu0 %v1869
    %2012 = vmatpush2.bf16.msra.mxu0 %v1868
    %2013 = vmatprep.subr.bf16.mxu0 %v1867
    %2014 = vmatpush2.bf16.msra.mxu0 %v1866
    %2015 = vmatprep.subr.bf16.mxu0 %v1865
    %2016 = vmatpush2.bf16.msra.mxu0 %v1864
    %2017 = vmatprep.mubr.bf16.mxu0 %v1619
    %2018 = vmatmul.mubr.bf16.gmra.mxu0 %v1618
    %v2019 = vpop.f32.mrf.mxu0
    %v2020 = vadd.f32 %v1979, %v2019
    %v2021 = vpop.f32.mrf.mxu0
    %v2022 = vadd.f32 %v1981, %v2021
    %v2023 = vpop.f32.mrf.mxu0
    %v2024 = vpop.f32.mrf.mxu0
    %2025 = vdwg.mxu0
    %vm2026 = vcmp.gt.f32.partialorder %v2020, 0.0
    %vm2027 = vcmp.gt.f32.partialorder %v2022, 0.0
    %v2028 = vmul.f32 %v2020, 0.1
    %v2029 = vmul.f32 %v2022, 0.1
    %v2030 = vsel %vm2026, %v2020, %v2028
    %v2031 = vsel %vm2027, %v2022, %v2029
    %v2032 = vpack.c.bf16 %v2030, %v2030
    %v2033 = vpack.c.bf16 %v2031, %v2031
    %v2034 = vld [vmem:[%s6] sm:$0xf]
    %v2035 = vld [vmem:[%s6 + $0x4] sm:$0xf]
    %v2036 = vld [vmem:[%s6 + $0x8] sm:$0xf]
    %v2037 = vld [vmem:[%s6 + $0xc] sm:$0xf]
    %v2038 = vld [vmem:[%s6 + $0x10] sm:$0xf]
    %v2039 = vld [vmem:[%s6 + $0x14] sm:$0xf]
    %v2040 = vld [vmem:[%s6 + $0x18] sm:$0xf]
    %v2041 = vld [vmem:[%s6 + $0x1c] sm:$0xf]
    %v2042 = vld [vmem:[%s6 + $0x20] sm:$0xf]
    %v2043 = vld [vmem:[%s6 + $0x24] sm:$0xf]
    %v2044 = vld [vmem:[%s6 + $0x28] sm:$0xf]
    %v2045 = vld [vmem:[%s6 + $0x2c] sm:$0xf]
    %v2046 = vld [vmem:[%s6 + $0x30] sm:$0xf]
    %v2047 = vld [vmem:[%s6 + $0x34] sm:$0xf]
    %v2048 = vld [vmem:[%s6 + $0x38] sm:$0xf]
    %v2049 = vld [vmem:[%s6 + $0x3c] sm:$0xf]
    %v2050 = vld [vmem:[%s6 + $0x40] sm:$0xf]
    %v2051 = vld [vmem:[%s6 + $0x44] sm:$0xf]
    %v2052 = vld [vmem:[%s6 + $0x48] sm:$0xf]
    %v2053 = vld [vmem:[%s6 + $0x4c] sm:$0xf]
    %v2054 = vld [vmem:[%s6 + $0x50] sm:$0xf]
    %v2055 = vld [vmem:[%s6 + $0x54] sm:$0xf]
    %v2056 = vld [vmem:[%s6 + $0x58] sm:$0xf]
    %v2057 = vld [vmem:[%s6 + $0x5c] sm:$0xf]
    %v2058 = vld [vmem:[%s6 + $0x60] sm:$0xf]
    %v2059 = vld [vmem:[%s6 + $0x64] sm:$0xf]
    %v2060 = vld [vmem:[%s6 + $0x68] sm:$0xf]
    %v2061 = vld [vmem:[%s6 + $0x6c] sm:$0xf]
    %v2062 = vld [vmem:[%s6 + $0x70] sm:$0xf]
    %v2063 = vld [vmem:[%s6 + $0x74] sm:$0xf]
    %v2064 = vld [vmem:[%s6 + $0x78] sm:$0xf]
    %v2065 = vld [vmem:[%s6 + $0x7c] sm:$0xf]
    %v2066 = vld [vmem:[%s7] sm:$0x1]
    %v2068 = vlaneseq
    %v2069 = vshrl.u32 %v2068, 7
    %v2070 = vsub.s32 0, %v2069
    %v2071 = vrot.slane %v2066, %v2070
    %v2105 = vunpack.c.l.b16 %v2034
    %v2106 = vunpack.c.l.b16 %v2035
    %v2107 = vunpack.c.l.b16 %v2036
    %v2108 = vunpack.c.l.b16 %v2037
    %v2109 = vunpack.c.l.b16 %v2038
    %v2110 = vunpack.c.l.b16 %v2039
    %v2111 = vunpack.c.l.b16 %v2040
    %v2112 = vunpack.c.l.b16 %v2041
    %v2113 = vunpack.c.l.b16 %v2042
    %v2114 = vunpack.c.l.b16 %v2043
    %v2115 = vunpack.c.l.b16 %v2044
    %v2116 = vunpack.c.l.b16 %v2045
    %v2117 = vunpack.c.l.b16 %v2046
    %v2118 = vunpack.c.l.b16 %v2047
    %v2119 = vunpack.c.l.b16 %v2048
    %v2120 = vunpack.c.l.b16 %v2049
    %v2121 = vunpack.c.l.b16 %v2050
    %v2122 = vunpack.c.l.b16 %v2051
    %v2123 = vunpack.c.l.b16 %v2052
    %v2124 = vunpack.c.l.b16 %v2053
    %v2125 = vunpack.c.l.b16 %v2054
    %v2126 = vunpack.c.l.b16 %v2055
    %v2127 = vunpack.c.l.b16 %v2056
    %v2128 = vunpack.c.l.b16 %v2057
    %v2129 = vunpack.c.l.b16 %v2058
    %v2130 = vunpack.c.l.b16 %v2059
    %v2131 = vunpack.c.l.b16 %v2060
    %v2132 = vunpack.c.l.b16 %v2061
    %v2133 = vunpack.c.l.b16 %v2062
    %v2134 = vunpack.c.l.b16 %v2063
    %v2135 = vunpack.c.l.b16 %v2064
    %v2136 = vunpack.c.l.b16 %v2065
    %v2137 = vpack.c.b16 %v2106, %v2105
    %v2138 = vpack.c.b16 %v2108, %v2107
    %v2139 = vpack.c.b16 %v2110, %v2109
    %v2140 = vpack.c.b16 %v2112, %v2111
    %v2141 = vpack.c.b16 %v2114, %v2113
    %v2142 = vpack.c.b16 %v2116, %v2115
    %v2143 = vpack.c.b16 %v2118, %v2117
    %v2144 = vpack.c.b16 %v2120, %v2119
    %v2145 = vpack.c.b16 %v2122, %v2121
    %v2146 = vpack.c.b16 %v2124, %v2123
    %v2147 = vpack.c.b16 %v2126, %v2125
    %v2148 = vpack.c.b16 %v2128, %v2127
    %v2149 = vpack.c.b16 %v2130, %v2129
    %v2150 = vpack.c.b16 %v2132, %v2131
    %v2151 = vpack.c.b16 %v2134, %v2133
    %v2152 = vpack.c.b16 %v2136, %v2135
    %2169 = vmatprep.subr.bf16.mxu0 0
    %2170 = vmatpush1.bf16.msra.mxu0 %v2144
    %2171 = vmatprep.subr.bf16.mxu0 0
    %2172 = vmatpush1.bf16.msra.mxu0 %v2143
    %2173 = vmatprep.subr.bf16.mxu0 0
    %2174 = vmatpush1.bf16.msra.mxu0 %v2142
    %2175 = vmatprep.subr.bf16.mxu0 0
    %2176 = vmatpush1.bf16.msra.mxu0 %v2141
    %2177 = vmatprep.subr.bf16.mxu0 0
    %2178 = vmatpush1.bf16.msra.mxu0 %v2140
    %2179 = vmatprep.subr.bf16.mxu0 0
    %2180 = vmatpush1.bf16.msra.mxu0 %v2139
    %2181 = vmatprep.subr.bf16.mxu0 0
    %2182 = vmatpush1.bf16.msra.mxu0 %v2138
    %2183 = vmatprep.subr.bf16.mxu0 0
    %2184 = vmatpush1.bf16.msra.mxu0 %v2137
    %2185 = vmatprep.subr.bf16.mxu0 0
    %2186 = vmatpush2.bf16.msra.mxu0 %v2152
    %2187 = vmatprep.subr.bf16.mxu0 0
    %2188 = vmatpush2.bf16.msra.mxu0 %v2151
    %2189 = vmatprep.subr.bf16.mxu0 0
    %2190 = vmatpush2.bf16.msra.mxu0 %v2150
    %2191 = vmatprep.subr.bf16.mxu0 0
    %2192 = vmatpush2.bf16.msra.mxu0 %v2149
    %2193 = vmatprep.subr.bf16.mxu0 0
    %2194 = vmatpush2.bf16.msra.mxu0 %v2148
    %2195 = vmatprep.subr.bf16.mxu0 0
    %2196 = vmatpush2.bf16.msra.mxu0 %v2147
    %2197 = vmatprep.subr.bf16.mxu0 0
    %2198 = vmatpush2.bf16.msra.mxu0 %v2146
    %2199 = vmatprep.subr.bf16.mxu0 0
    %2200 = vmatpush2.bf16.msra.mxu0 %v2145
    %2201 = vmatprep.mubr.bf16.mxu0 %v2033
    %2202 = vmatmul.mubr.bf16.gmra.mxu0 %v2032
    %v2203 = vpop.f32.mrf.mxu0
    %v2204 = vadd.f32 %v2071, %v2203
    %v2205 = vpop.f32.mrf.mxu0
    %v2206 = vpop.f32.mrf.mxu0
    %v2207 = vpop.f32.mrf.mxu0
    %2208 = vdwg.mxu0
    %2209 = vst [vmem:[#allocation7] sm:$0x3] %v2204
    // Predicated region
    $region42: #{enhanced_text_cnn_forward.1} parent=1 // pred_check
      _
    $region43: #{enhanced_text_cnn_forward.1} parent=1 // pred_check_branch
      %2211 = sbr.rel (0) target = $region45
    $region44: #{enhanced_text_cnn_forward.1} parent=1 // pred_region
      %s2213 = ssub.s32 32, 32
      %2214 = vsyncadd [#allocation4], %s2213
      %s2216 = sshll.u32 [#allocation7], 4
      %s2217 = int_to_ptr.vmem [resolvable:$true] %s2216
      %2219 = dma.vmem_to_hbm [thread:$0]  %s2217, 32, %s8, [#allocation4]
    $region45: #{enhanced_text_cnn_forward.1} parent=1 // pred_fallthru
      _
    // Predicated region
    $region46: #{enhanced_text_cnn_forward.1} parent=1 // pred_check
      _
    $region47: #{enhanced_text_cnn_forward.1} parent=1 // pred_check_branch
      %2221 = sbr.rel (0) target = $region49
    $region48: #{enhanced_text_cnn_forward.1} parent=1 // pred_region
      %2222 = dma.done [#allocation4], 32
    $region49: #{enhanced_text_cnn_forward.1} parent=1 // pred_fallthru
      _
    %2223 = vsyncpa [#allocation3], 1
    %2224 = vsyncpa [#allocation6], 1
    %2225 = vsyncpa [#allocation4], 1

</llo_original>
